<compile_context>
chip_gen: v7x
topology: tpu7x:2x2x1
jax: 0.10.0
libtpu: 0.0.40
codegen_flags: <defaults>
</compile_context>

<pallas_src>
import functools

import jax
import jax.numpy as jnp
from jax import lax
from jax.experimental import pallas as pl
from jax.experimental.pallas import tpu as pltpu


def _round_up(x, m):
    return ((x + m - 1) // m) * m


def _aug_loss_kernel(emb_tile_ref, aug_tile_ref, emb_full_ref, aug_full_ref,
                     loss1_ref, loss2_ref, *, cosine, inv_t):
    """One tile of TP rows against both full embedding tables.

    emb_tile_ref, aug_tile_ref : (TP, D) f32   rows i of emb / aug_emb
    emb_full_ref, aug_full_ref : (N,  D) f32   full tables (VMEM-resident)
    loss1_ref, loss2_ref       : (TP, 1) f32   per-row CE terms of the 2 losses
    """
    e_t = emb_tile_ref[...].astype(jnp.float32)        # (TP, D)
    a_t = aug_tile_ref[...].astype(jnp.float32)        # (TP, D)
    e_full = emb_full_ref[...].astype(jnp.float32)     # (N, D)
    a_full = aug_full_ref[...].astype(jnp.float32)     # (N, D)

    # Rows of logits   (for loss_1): emb_tile @ aug_emb.T -> (TP, N)
    # Rows of logits.T (for loss_2): aug_tile @ emb.T     -> (TP, N)
    logits1 = lax.dot_general(e_t, a_full, (((1,), (1,)), ((), ())),
                              preferred_element_type=jnp.float32)
    logits2 = lax.dot_general(a_t, e_full, (((1,), (1,)), ((), ())),
                              preferred_element_type=jnp.float32)

    # Diagonal logits[i, i] = emb[i] . aug_emb[i], shared by both branches;
    # computed from the (TP, D) tiles only — no gather over the (TP, N) tile.
    diag = jnp.sum(e_t * a_t, axis=-1, keepdims=True)                    # (TP,1)

    if cosine:
        e_t_norm = jnp.sqrt(jnp.sum(e_t * e_t, axis=-1, keepdims=True))      # (TP,1)
        a_t_norm = jnp.sqrt(jnp.sum(a_t * a_t, axis=-1, keepdims=True))      # (TP,1)
        e_full_norm = jnp.sqrt(jnp.sum(e_full * e_full, axis=-1))[None, :]   # (1,N)
        a_full_norm = jnp.sqrt(jnp.sum(a_full * a_full, axis=-1))[None, :]   # (1,N)
        logits1 = logits1 * (inv_t / (e_t_norm * a_full_norm + 1e-5))
        logits2 = logits2 * (inv_t / (a_t_norm * e_full_norm + 1e-5))
        diag = diag * (inv_t / (e_t_norm * a_t_norm + 1e-5))

    def row_lse(x):  # stable logsumexp over the N (lane) axis
        m = jnp.max(x, axis=-1, keepdims=True)
        return m + jnp.log(jnp.sum(jnp.exp(x - m), axis=-1, keepdims=True))

    loss1_ref[...] = row_lse(logits1) - diag
    loss2_ref[...] = row_lse(logits2) - diag


def aug_loss_forward(emb, aug_emb, ent_num, sim_method='inner', t=0.08,
                     tile_rows=128):
    """JAX/Pallas equivalent of Aug_loss.forward(emb, aug_emb, ent_num, ...)."""
    n, d = emb.shape
    assert aug_emb.shape == (n, d)
    assert ent_num == n, "labels = arange(ent_num) requires ent_num == emb.shape[0]"
    assert sim_method in ('inner', 'cosine')

    emb = emb.astype(jnp.float32)
    aug_emb = aug_emb.astype(jnp.float32)

    # Large row tile (multiple of 8) for MXU fill; pad the row dimension so the
    # grid is exact.  Padded rows are masked out of the mean below.
    tp = _round_up(min(int(tile_rows), _round_up(n, 8)), 8)
    n_pad = _round_up(n, tp)
    pad = n_pad - n
    emb_rows = jnp.pad(emb, ((0, pad), (0, 0))) if pad else emb
    aug_rows = jnp.pad(aug_emb, ((0, pad), (0, 0))) if pad else aug_emb

    kernel = functools.partial(_aug_loss_kernel,
                               cosine=(sim_method == 'cosine'),
                               inv_t=1.0 / float(t))

    loss1_rows, loss2_rows = pl.pallas_call(
        kernel,
        out_shape=(jax.ShapeDtypeStruct((n_pad, 1), jnp.float32),
                   jax.ShapeDtypeStruct((n_pad, 1), jnp.float32)),
        grid_spec=pltpu.PrefetchScalarGridSpec(
            num_scalar_prefetch=0,
            grid=(n_pad // tp,),
            in_specs=[
                pl.BlockSpec((tp, d), lambda i: (i, 0)),   # emb rows of tile i
                pl.BlockSpec((tp, d), lambda i: (i, 0)),   # aug_emb rows of tile i
                # Full tables: constant index maps -> DMA'd once, stay resident
                # in VMEM across the whole row grid (no per-step re-copy).
                pl.BlockSpec((n, d), lambda i: (0, 0)),    # emb table
                pl.BlockSpec((n, d), lambda i: (0, 0)),    # aug_emb table
            ],
            out_specs=[pl.BlockSpec((tp, 1), lambda i: (i, 0)),
                       pl.BlockSpec((tp, 1), lambda i: (i, 0))],
        ),
        compiler_params=pltpu.CompilerParams(
            dimension_semantics=("parallel",),
            vmem_limit_bytes=64 << 20),
    )(emb_rows, aug_rows, emb, aug_emb)

    if pad:
        valid = (jnp.arange(n_pad) < n)[:, None].astype(jnp.float32)
        loss_1 = jnp.sum(loss1_rows * valid) / n
        loss_2 = jnp.sum(loss2_rows * valid) / n
    else:
        loss_1 = jnp.mean(loss1_rows)
        loss_2 = jnp.mean(loss2_rows)
    return (loss_1 + loss_2) / 2.0


# --------------------------- pure-JAX reference --------------------------- #
def _reference(emb, aug_emb, ent_num, sim_method='inner', t=0.08):
    hp = jax.lax.Precision.HIGHEST
    if sim_method == 'cosine':
        n1 = jnp.linalg.norm(emb, axis=1, keepdims=True)
        n2 = jnp.linalg.norm(aug_emb, axis=1, keepdims=True)
        logits = jnp.dot(emb, aug_emb.T, precision=hp)
        logits = logits / (n1 * n2.T + 1e-5)
        logits = logits / t
    else:
        logits = jnp.dot(emb, aug_emb.T, precision=hp)
    labels = jnp.arange(ent_num)

    def ce(lg):  # F.cross_entropy with reduction='mean'
        lse = jax.scipy.special.logsumexp(lg, axis=-1)
        true = lg[jnp.arange(lg.shape[0]), labels]
        return jnp.mean(lse - true)

    return (ce(logits) + ce(logits.T)) / 2.0


if __name__ == "__main__":
    key = jax.random.PRNGKey(0)
    ent_num, dim = 256, 64

    k1, k2 = jax.random.split(key)
    emb = 0.2 * jax.random.normal(k1, (ent_num, dim), dtype=jnp.float32)
    aug_emb = emb + 0.05 * jax.random.normal(k2, (ent_num, dim), dtype=jnp.float32)

    # sim_method='inner' (default path)
    loss = aug_loss_forward(emb, aug_emb, ent_num, sim_method='inner', t=0.08)
    loss = jax.block_until_ready(loss)
    ref = _reference(emb, aug_emb, ent_num, 'inner', 0.08)
    assert jnp.allclose(loss, ref, rtol=1e-3, atol=1e-3), (loss, ref)

    # sim_method='cosine'
    loss_c = aug_loss_forward(emb, aug_emb, ent_num, sim_method='cosine', t=0.08)
    loss_c = jax.block_until_ready(loss_c)
    ref_c = _reference(emb, aug_emb, ent_num, 'cosine', 0.08)
    assert jnp.allclose(loss_c, ref_c, rtol=1e-3, atol=1e-3), (loss_c, ref_c)

    # N not a multiple of the row tile: exercises the padding/masking path
    n2 = 200
    loss_p = aug_loss_forward(emb[:n2], aug_emb[:n2], n2)
    loss_p = jax.block_until_ready(loss_p)
    ref_p = _reference(emb[:n2], aug_emb[:n2], n2)
    assert jnp.allclose(loss_p, ref_p, rtol=1e-3, atol=1e-3), (loss_p, ref_p)

    print("KERNEL_OK")
</pallas_src>

<mosaic_0001>
module attributes {stable_mosaic.version = 11 : i64} {
  func.func @_aug_loss_kernel(%arg0: i32, %arg1: memref<128x64xf32, #tpu.memory_space<vmem>>, %arg2: memref<128x64xf32, #tpu.memory_space<vmem>>, %arg3: memref<256x64xf32, #tpu.memory_space<vmem>>, %arg4: memref<256x64xf32, #tpu.memory_space<vmem>>, %arg5: memref<128x1xf32, #tpu.memory_space<vmem>>, %arg6: memref<128x1xf32, #tpu.memory_space<vmem>>) attributes {dimension_semantics = [#tpu.dimension_semantics<parallel>], iteration_bounds = array<i64: 2>, scalar_prefetch = 0 : i64, scratch_operands = 0 : i64, tpu.core_type = #tpu.core_type<tc>, window_params = [{transform_indices = @transform_0, window_bounds = array<i64: 128, 64>}, {transform_indices = @transform_1, window_bounds = array<i64: 128, 64>}, {pipeline_mode = #tpu.pipeline_mode<synchronous>, transform_indices = @transform_2, window_bounds = array<i64: 256, 64>}, {pipeline_mode = #tpu.pipeline_mode<synchronous>, transform_indices = @transform_3, window_bounds = array<i64: 256, 64>}, {transform_indices = @transform_4, window_bounds = array<i64: 128, 1>}, {transform_indices = @transform_5, window_bounds = array<i64: 128, 1>}]} {
    %c0 = arith.constant 0 : index
    %c0_0 = arith.constant 0 : index
    %0 = vector.load %arg1[%c0, %c0_0] : memref<128x64xf32, #tpu.memory_space<vmem>>, vector<128x64xf32>
    %c0_1 = arith.constant 0 : index
    %c0_2 = arith.constant 0 : index
    %1 = vector.load %arg2[%c0_1, %c0_2] : memref<128x64xf32, #tpu.memory_space<vmem>>, vector<128x64xf32>
    %c0_3 = arith.constant 0 : index
    %c0_4 = arith.constant 0 : index
    %2 = vector.load %arg3[%c0_3, %c0_4] : memref<256x64xf32, #tpu.memory_space<vmem>>, vector<256x64xf32>
    %c0_5 = arith.constant 0 : index
    %c0_6 = arith.constant 0 : index
    %3 = vector.load %arg4[%c0_5, %c0_6] : memref<256x64xf32, #tpu.memory_space<vmem>>, vector<256x64xf32>
    %cst = arith.constant dense<0.000000e+00> : vector<128x256xf32>
    %4 = tpu.matmul %0, %3, %cst {dimension_numbers = #tpu.dot_dimension_numbers<[1], [1], [0], [0], [0, 0, 1, 0], [], []>} : vector<128x64xf32>, vector<256x64xf32>, vector<128x256xf32> -> vector<128x256xf32>
    %cst_7 = arith.constant dense<0.000000e+00> : vector<128x256xf32>
    %5 = tpu.matmul %1, %2, %cst_7 {dimension_numbers = #tpu.dot_dimension_numbers<[1], [1], [0], [0], [0, 0, 1, 0], [], []>} : vector<128x64xf32>, vector<256x64xf32>, vector<128x256xf32> -> vector<128x256xf32>
    %6 = arith.mulf %0, %1 : vector<128x64xf32>
    %cst_8 = arith.constant dense<0.000000e+00> : vector<128xf32>
    %7 = vector.multi_reduction <add>, %6, %cst_8 [1] : vector<128x64xf32> to vector<128xf32>
    %8 = vector.shape_cast %7 : vector<128xf32> to vector<128x1xf32>
    %cst_9 = arith.constant dense<0xFF800000> : vector<128xf32>
    %9 = vector.multi_reduction <maximumf>, %4, %cst_9 [1] : vector<128x256xf32> to vector<128xf32>
    %10 = vector.shape_cast %9 : vector<128xf32> to vector<128x1xf32>
    %11 = vector.broadcast %10 : vector<128x1xf32> to vector<128x256xf32>
    %12 = arith.subf %4, %11 : vector<128x256xf32>
    %13 = math.exp %12 : vector<128x256xf32>
    %cst_10 = arith.constant dense<0.000000e+00> : vector<128xf32>
    %14 = vector.multi_reduction <add>, %13, %cst_10 [1] : vector<128x256xf32> to vector<128xf32>
    %15 = vector.shape_cast %14 : vector<128xf32> to vector<128x1xf32>
    %16 = math.log %15 : vector<128x1xf32>
    %17 = arith.addf %10, %16 : vector<128x1xf32>
    %18 = arith.subf %17, %8 : vector<128x1xf32>
    %c0_11 = arith.constant 0 : index
    %c0_12 = arith.constant 0 : index
    %19 = vector.load %arg5[%c0_11, %c0_12] : memref<128x1xf32, #tpu.memory_space<vmem>>, vector<128x1xf32>
    tpu.vector_store %arg5[%c0_11, %c0_12], %18 {strides = array<i32>} : memref<128x1xf32, #tpu.memory_space<vmem>>, vector<128x1xf32>,
    %cst_13 = arith.constant dense<0xFF800000> : vector<128xf32>
    %20 = vector.multi_reduction <maximumf>, %5, %cst_13 [1] : vector<128x256xf32> to vector<128xf32>
    %21 = vector.shape_cast %20 : vector<128xf32> to vector<128x1xf32>
    %22 = vector.broadcast %21 : vector<128x1xf32> to vector<128x256xf32>
    %23 = arith.subf %5, %22 : vector<128x256xf32>
    %24 = math.exp %23 : vector<128x256xf32>
    %cst_14 = arith.constant dense<0.000000e+00> : vector<128xf32>
    %25 = vector.multi_reduction <add>, %24, %cst_14 [1] : vector<128x256xf32> to vector<128xf32>
    %26 = vector.shape_cast %25 : vector<128xf32> to vector<128x1xf32>
    %27 = math.log %26 : vector<128x1xf32>
    %28 = arith.addf %21, %27 : vector<128x1xf32>
    %29 = arith.subf %28, %8 : vector<128x1xf32>
    %c0_15 = arith.constant 0 : index
    %c0_16 = arith.constant 0 : index
    %30 = vector.load %arg6[%c0_15, %c0_16] : memref<128x1xf32, #tpu.memory_space<vmem>>, vector<128x1xf32>
    tpu.vector_store %arg6[%c0_15, %c0_16], %29 {strides = array<i32>} : memref<128x1xf32, #tpu.memory_space<vmem>>, vector<128x1xf32>,
    return
  }
  func.func @transform_0(%arg0: i32) -> (i32, i32) {
    %c0_i32 = arith.constant 0 : i32
    %c0_i32_0 = arith.constant 0 : i32
    return %arg0, %c0_i32 : i32, i32
  }
  func.func @transform_1(%arg0: i32) -> (i32, i32) {
    %c0_i32 = arith.constant 0 : i32
    %c0_i32_0 = arith.constant 0 : i32
    return %arg0, %c0_i32 : i32, i32
  }
  func.func @transform_2(%arg0: i32) -> (i32, i32) {
    %c0_i32 = arith.constant 0 : i32
    %c0_i32_0 = arith.constant 0 : i32
    %c0_i32_1 = arith.constant 0 : i32
    return %c0_i32, %c0_i32_0 : i32, i32
  }
  func.func @transform_3(%arg0: i32) -> (i32, i32) {
    %c0_i32 = arith.constant 0 : i32
    %c0_i32_0 = arith.constant 0 : i32
    %c0_i32_1 = arith.constant 0 : i32
    return %c0_i32, %c0_i32_0 : i32, i32
  }
  func.func @transform_4(%arg0: i32) -> (i32, i32) {
    %c0_i32 = arith.constant 0 : i32
    %c0_i32_0 = arith.constant 0 : i32
    return %arg0, %c0_i32 : i32, i32
  }
  func.func @transform_5(%arg0: i32) -> (i32, i32) {
    %c0_i32 = arith.constant 0 : i32
    %c0_i32_0 = arith.constant 0 : i32
    return %arg0, %c0_i32 : i32, i32
  }
}

</mosaic_0001>

<llo_original>
// kernel: tpu_custom_call.1
$region0: #{tpu_custom_call.1}
  #allocation0 [shape = 'u32[]', space=smem, size = 0x4, offset = 0x4, fixed_abs, tag = 'smem constant byte address 0x4 - core index']
  #allocation1 [shape = 'u32[144,128]{1,0:T(1,128)}', space=vmem, size = 0x12000, scoped, tag = 'internal scratch']
  %s0 = inlined_call_operand.hbm [shape: f32[256,64], index: 0, kind: input, shape index: {}]
  %s1 = inlined_call_operand.hbm [shape: f32[256,64], index: 1, kind: input, shape index: {}]
  %s2 = inlined_call_operand.hbm [shape: f32[256,64], index: 2, kind: input, shape index: {}]
  %s3 = inlined_call_operand.hbm [shape: f32[256,64], index: 3, kind: input, shape index: {}]
  %s4 = inlined_call_operand.hbm [shape: f32[256,1], index: 4, kind: output, shape index: {0}]
  %s5 = inlined_call_operand.hbm [shape: f32[256,1], index: 5, kind: output, shape index: {1}]
  %6 = xla_tuple %s4, %s5
  %s7 = sld [smem:[#allocation0]]
  $region73: #{tpu_custom_call.1} parent=0
    _
  %s9 = ssub.s32 1, %s7
  %s10 = scalar_select 0, %s9, %s7
  $region1: #{tpu_custom_call.1} parent=0
    #allocation2 [shape = 'u8[131072]{0}', space=vmem, size = 0x20000, scoped, tag = 'input window, operand 0']
    #allocation3 [shape = 's32[2]{0}', space=sflag, size = 0x8, scoped, tag = 'scoped memory for tpu_custom_call.1']
    #allocation4 [shape = 's32[2]{0}', space=sflag, size = 0x8, scoped, tag = 'scoped memory for tpu_custom_call.1']
    #allocation5 [shape = 'u8[131072]{0}', space=vmem, size = 0x20000, scoped, tag = 'input window, operand 1']
    #allocation6 [shape = 's32[2]{0}', space=sflag, size = 0x8, scoped, tag = 'scoped memory for tpu_custom_call.1']
    #allocation7 [shape = 'u8[131072]{0}', space=vmem, size = 0x20000, scoped, tag = 'input window, operand 2, single buffered']
    #allocation8 [shape = 'u8[131072]{0}', space=vmem, size = 0x20000, scoped, tag = 'input window, operand 3, single buffered']
    #allocation9 [shape = 's32[1]{0}', space=sflag, size = 0x4, scoped, tag = 'scoped memory for tpu_custom_call.1']
    #allocation10 [shape = 'u8[131072]{0}', space=vmem, size = 0x20000, scoped, tag = 'output window, operand 0']
    #allocation11 [shape = 'u8[131072]{0}', space=vmem, size = 0x20000, scoped, tag = 'output window, operand 1']
    #allocation12 [shape = 's32[2]{0}', space=sflag, size = 0x8, scoped, tag = 'scoped memory for tpu_custom_call.1']
    %11 = vsyncpa [#allocation3], 0
    %s12 = scalar_lea.sflag [#allocation3], 1
    %13 = vsyncpa %s12, 0
    %14 = vsyncpa [#allocation6], 0
    %s15 = scalar_lea.sflag [#allocation6], 1
    %16 = vsyncpa %s15, 0
    %17 = vsyncpa [#allocation9], 0
    %18 = vsyncpa [#allocation4], 0
    %s19 = scalar_lea.sflag [#allocation4], 1
    %20 = vsyncpa %s19, 0
    %21 = vsyncpa [#allocation12], 0
    %s22 = scalar_lea.sflag [#allocation12], 1
    %23 = vsyncpa %s22, 0
    loop: start=0, step=1, limit=4
    $region2: #{tpu_custom_call.1} parent=1 // loop_pre_header
      _
    $region3: #{tpu_custom_call.1} parent=1 // loop_header
      %s25 = sphi 0, %s29
      %p26 = scmp.ge.s32.totalorder %s25, 4
      %s35 = sphi 0, %s37
      %s38 = sphi 0, %s35
      %s39 = sphi 0, %s38
      %s55 = sphi 0, %s39
      %s61 = sphi 0, %s63
      %s64 = sphi 0, %s61
      %s65 = sphi 0, %s64
      %s81 = sphi 0, %s65
      %s85 = sphi 0, %s85
      %s87 = sphi 0, %s85
      %s88 = sphi 0, %s87
      %s102 = sphi 0, %s88
      %s106 = sphi 0, %s106
      %s108 = sphi 0, %s106
      %s109 = sphi 0, %s108
      %s123 = sphi 0, %s109
      %s129 = sphi 0, %s131
      %s132 = sphi 0, %s129
      %s133 = sphi 0, %s132
      %s149 = sphi 0, %s133
      %s155 = sphi 0, %s157
      %s158 = sphi 0, %s155
      %s159 = sphi 0, %s158
      %s175 = sphi 0, %s159
    $region4: #{tpu_custom_call.1} parent=1 // loop_header_branch
      %28 = sbr.rel (%p26) target = $region8
    $region5: #{tpu_custom_call.1} parent=1 // loop_body
      %s30 = ssub.s32 %s25, 1
      %s31 = ssub.s32 %s25, 2
      %s32 = sadd.s32 %s25, 1
      %s33 = ssub.s32 %s25, %s32
      %p34 = scmp.eq.s32.totalorder %s33, 0
      %s36 = sadd.s32 %s35, 1
      %s37 = scalar_select %p34, %s35, %s36
      %p40 = pneg %p34
      %p41 = scmp.eq.s32.totalorder %s25, 1
      %p42 = por %p40, %p41
      %p43 = scmp.ne.s32.totalorder %s35, %s38
      %p44 = scmp.eq.s32.totalorder %s25, 0
      %p45 = por %p43, %p44
      %p46 = scmp.ne.s32.totalorder %s35, %s38
      %p47 = scmp.eq.s32.totalorder %s30, 1
      %p48 = por %p46, %p47
      %p49 = scmp.ne.s32.totalorder %s38, %s39
      %p50 = scmp.eq.s32.totalorder %s30, 0
      %p51 = por %p49, %p50
      %p52 = scmp.ne.s32.totalorder %s38, %s39
      %p53 = scmp.eq.s32.totalorder %s31, 1
      %p54 = por %p52, %p53
      %p56 = scmp.ne.s32.totalorder %s39, %s55
      %p57 = scmp.eq.s32.totalorder %s31, 0
      %p58 = por %p56, %p57
      %s59 = ssub.s32 %s25, %s32
      %p60 = scmp.eq.s32.totalorder %s59, 0
      %s62 = sadd.s32 %s61, 1
      %s63 = scalar_select %p60, %s61, %s62
      %p66 = pneg %p60
      %p67 = scmp.eq.s32.totalorder %s25, 1
      %p68 = por %p66, %p67
      %p69 = scmp.ne.s32.totalorder %s61, %s64
      %p70 = scmp.eq.s32.totalorder %s25, 0
      %p71 = por %p69, %p70
      %p72 = scmp.ne.s32.totalorder %s61, %s64
      %p73 = scmp.eq.s32.totalorder %s30, 1
      %p74 = por %p72, %p73
      %p75 = scmp.ne.s32.totalorder %s64, %s65
      %p76 = scmp.eq.s32.totalorder %s30, 0
      %p77 = por %p75, %p76
      %p78 = scmp.ne.s32.totalorder %s64, %s65
      %p79 = scmp.eq.s32.totalorder %s31, 1
      %p80 = por %p78, %p79
      %p82 = scmp.ne.s32.totalorder %s65, %s81
      %p83 = scmp.eq.s32.totalorder %s31, 0
      %p84 = por %p82, %p83
      %s86 = sadd.s32 %s85, 1
      %p89 = scmp.eq.s32.totalorder %s25, 1
      %p90 = scmp.ne.s32.totalorder %s85, %s87
      %p91 = scmp.eq.s32.totalorder %s25, 0
      %p92 = por %p90, %p91
      %p93 = scmp.ne.s32.totalorder %s85, %s87
      %p94 = scmp.eq.s32.totalorder %s30, 1
      %p95 = por %p93, %p94
      %p96 = scmp.ne.s32.totalorder %s87, %s88
      %p97 = scmp.eq.s32.totalorder %s30, 0
      %p98 = por %p96, %p97
      %p99 = scmp.ne.s32.totalorder %s87, %s88
      %p100 = scmp.eq.s32.totalorder %s31, 1
      %p101 = por %p99, %p100
      %p103 = scmp.ne.s32.totalorder %s88, %s102
      %p104 = scmp.eq.s32.totalorder %s31, 0
      %p105 = por %p103, %p104
      %s107 = sadd.s32 %s106, 1
      %p110 = scmp.eq.s32.totalorder %s25, 1
      %p111 = scmp.ne.s32.totalorder %s106, %s108
      %p112 = scmp.eq.s32.totalorder %s25, 0
      %p113 = por %p111, %p112
      %p114 = scmp.ne.s32.totalorder %s106, %s108
      %p115 = scmp.eq.s32.totalorder %s30, 1
      %p116 = por %p114, %p115
      %p117 = scmp.ne.s32.totalorder %s108, %s109
      %p118 = scmp.eq.s32.totalorder %s30, 0
      %p119 = por %p117, %p118
      %p120 = scmp.ne.s32.totalorder %s108, %s109
      %p121 = scmp.eq.s32.totalorder %s31, 1
      %p122 = por %p120, %p121
      %p124 = scmp.ne.s32.totalorder %s109, %s123
      %p125 = scmp.eq.s32.totalorder %s31, 0
      %p126 = por %p124, %p125
      %s127 = ssub.s32 %s25, %s32
      %p128 = scmp.eq.s32.totalorder %s127, 0
      %s130 = sadd.s32 %s129, 1
      %s131 = scalar_select %p128, %s129, %s130
      %p134 = pneg %p128
      %p135 = scmp.eq.s32.totalorder %s25, 1
      %p136 = por %p134, %p135
      %p137 = scmp.ne.s32.totalorder %s129, %s132
      %p138 = scmp.eq.s32.totalorder %s25, 0
      %p139 = por %p137, %p138
      %p140 = scmp.ne.s32.totalorder %s129, %s132
      %p141 = scmp.eq.s32.totalorder %s30, 1
      %p142 = por %p140, %p141
      %p143 = scmp.ne.s32.totalorder %s132, %s133
      %p144 = scmp.eq.s32.totalorder %s30, 0
      %p145 = por %p143, %p144
      %p146 = scmp.ne.s32.totalorder %s132, %s133
      %p147 = scmp.eq.s32.totalorder %s31, 1
      %p148 = por %p146, %p147
      %p150 = scmp.ne.s32.totalorder %s133, %s149
      %p151 = scmp.eq.s32.totalorder %s31, 0
      %p152 = por %p150, %p151
      %s153 = ssub.s32 %s25, %s32
      %p154 = scmp.eq.s32.totalorder %s153, 0
      %s156 = sadd.s32 %s155, 1
      %s157 = scalar_select %p154, %s155, %s156
      %p160 = pneg %p154
      %p161 = scmp.eq.s32.totalorder %s25, 1
      %p162 = por %p160, %p161
      %p163 = scmp.ne.s32.totalorder %s155, %s158
      %p164 = scmp.eq.s32.totalorder %s25, 0
      %p165 = por %p163, %p164
      %p166 = scmp.ne.s32.totalorder %s155, %s158
      %p167 = scmp.eq.s32.totalorder %s30, 1
      %p168 = por %p166, %p167
      %p169 = scmp.ne.s32.totalorder %s158, %s159
      %p170 = scmp.eq.s32.totalorder %s30, 0
      %p171 = por %p169, %p170
      %p172 = scmp.ne.s32.totalorder %s158, %s159
      %p173 = scmp.eq.s32.totalorder %s31, 1
      %p174 = por %p172, %p173
      %p176 = scmp.ne.s32.totalorder %s159, %s175
      %p177 = scmp.eq.s32.totalorder %s31, 0
      %p178 = por %p176, %p177
      %p179 = scmp.le.s32.totalorder 1, %s25
      %p180 = scmp.lt.s32.totalorder %s25, 3
      %p181 = pnand %p179, %p180
      %p182 = pneg %p181
      // Predicated region
      $region9: #{tpu_custom_call.1} parent=5 // pred_check
        _
      $region10: #{tpu_custom_call.1} parent=5 // pred_check_branch
        %184 = sbr.rel (%p181) target = $region12
      $region11: #{tpu_custom_call.1} parent=5 // pred_region
        %s185 = ssub.s32 %s25, 1
        // Predicated region
        $region13: #{tpu_custom_call.1} parent=11 // pred_check
          %p186 = pneg %p98
        $region14: #{tpu_custom_call.1} parent=11 // pred_check_branch
          %188 = sbr.rel (%p186) target = $region16
        $region15: #{tpu_custom_call.1} parent=11 // pred_region
          %s190 = ssub.s32 4096, 4096
          %191 = vsyncadd [#allocation6], %s190
          %s192 = sshll.u32 [#allocation7], 4
          %s193 = int_to_ptr.vmem [resolvable:$true] %s192
          %198 = dma.hbm_to_vmem [thread:$0]  %s2, 4096, %s193, [#allocation6], 128, 128, 8
        $region16: #{tpu_custom_call.1} parent=11 // pred_fallthru
          _
        // Predicated region
        $region17: #{tpu_custom_call.1} parent=11 // pred_check
          %p199 = pneg %p119
        $region18: #{tpu_custom_call.1} parent=11 // pred_check_branch
          %201 = sbr.rel (%p199) target = $region20
        $region19: #{tpu_custom_call.1} parent=11 // pred_region
          %s203 = ssub.s32 4096, 4096
          %204 = vsyncadd [#allocation9], %s203
          %s205 = sshll.u32 [#allocation8], 4
          %s206 = int_to_ptr.vmem [resolvable:$true] %s205
          %211 = dma.hbm_to_vmem [thread:$0]  %s3, 4096, %s206, [#allocation9], 128, 128, 8
        $region20: #{tpu_custom_call.1} parent=11 // pred_fallthru
          _
      $region12: #{tpu_custom_call.1} parent=5 // pred_fallthru
        _
      %p212 = scmp.lt.s32.totalorder %s25, 2
      // Predicated region
      $region21: #{tpu_custom_call.1} parent=5 // pred_check
        %p213 = pneg %p212
      $region22: #{tpu_custom_call.1} parent=5 // pred_check_branch
        %215 = sbr.rel (%p213) target = $region24
      $region23: #{tpu_custom_call.1} parent=5 // pred_region
        // Predicated region
        $region25: #{tpu_custom_call.1} parent=23 // pred_check
          %p216 = pneg %p45
        $region26: #{tpu_custom_call.1} parent=23 // pred_check_branch
          %218 = sbr.rel (%p216) target = $region28
        $region27: #{tpu_custom_call.1} parent=23 // pred_region
          %s219 = sand.u32 %s35, 1
          %s220 = scalar_lea.sflag [#allocation3], %s219
          %s221 = sand.u32 %s35, 1
          %s222 = smul.addr %s221, 128
          %s223 = scalar_lea.vmem [#allocation2], %s222
          %s224 = smul.u32 16, %s25
          %s226 = ssub.s32 2048, 2048
          %227 = vsyncadd %s220, %s226
          %s228 = smul.addr %s224, 128
          %s229 = scalar_lea.hbm %s0, %s228
          %s230 = sshll.u32 %s223, 4
          %s231 = int_to_ptr.vmem [resolvable:$true] %s230
          %236 = dma.hbm_to_vmem [thread:$0]  %s229, 2048, %s231, %s220, 128, 128, 8
        $region28: #{tpu_custom_call.1} parent=23 // pred_fallthru
          _
        // Predicated region
        $region29: #{tpu_custom_call.1} parent=23 // pred_check
          %p237 = pneg %p71
        $region30: #{tpu_custom_call.1} parent=23 // pred_check_branch
          %239 = sbr.rel (%p237) target = $region32
        $region31: #{tpu_custom_call.1} parent=23 // pred_region
          %s240 = sand.u32 %s25, 1
          %s241 = scalar_lea.sflag [#allocation6], %s240
          %s242 = sand.u32 %s61, 1
          %s243 = smul.addr %s242, 128
          %s244 = scalar_lea.vmem [#allocation5], %s243
          %s245 = smul.u32 16, %s25
          %s247 = ssub.s32 2048, 2048
          %248 = vsyncadd %s241, %s247
          %s249 = smul.addr %s245, 128
          %s250 = scalar_lea.hbm %s1, %s249
          %s251 = sshll.u32 %s244, 4
          %s252 = int_to_ptr.vmem [resolvable:$true] %s251
          %257 = dma.hbm_to_vmem [thread:$0]  %s250, 2048, %s252, %s241, 128, 128, 8
        $region32: #{tpu_custom_call.1} parent=23 // pred_fallthru
          _
      $region24: #{tpu_custom_call.1} parent=5 // pred_fallthru
        _
      %p258 = scmp.le.s32.totalorder 1, %s25
      %p259 = scmp.lt.s32.totalorder %s25, 3
      %p260 = pnand %p258, %p259
      %p261 = pneg %p260
      // Predicated region
      $region33: #{tpu_custom_call.1} parent=5 // pred_check
        _
      $region34: #{tpu_custom_call.1} parent=5 // pred_check_branch
        %263 = sbr.rel (%p260) target = $region36
      $region35: #{tpu_custom_call.1} parent=5 // pred_region
        %s264 = ssub.s32 %s25, 1
        %s265 = sand.u32 %s38, 1
        %s266 = scalar_lea.sflag [#allocation3], %s265
        %s267 = sand.u32 %s38, 1
        %s268 = smul.addr %s267, 128
        %s269 = scalar_lea.vmem [#allocation2], %s268
        // Predicated region
        $region37: #{tpu_custom_call.1} parent=35 // pred_check
          %p270 = pneg %p51
        $region38: #{tpu_custom_call.1} parent=35 // pred_check_branch
          %272 = sbr.rel (%p270) target = $region40
        $region39: #{tpu_custom_call.1} parent=35 // pred_region
          %273 = dma.done %s266, 2048
        $region40: #{tpu_custom_call.1} parent=35 // pred_fallthru
          _
        %s274 = sand.u32 %s30, 1
        %s275 = scalar_lea.sflag [#allocation6], %s274
        %s276 = sand.u32 %s64, 1
        %s277 = smul.addr %s276, 128
        %s278 = scalar_lea.vmem [#allocation5], %s277
        // Predicated region
        $region41: #{tpu_custom_call.1} parent=35 // pred_check
          %p279 = pneg %p77
        $region42: #{tpu_custom_call.1} parent=35 // pred_check_branch
          %281 = sbr.rel (%p279) target = $region44
        $region43: #{tpu_custom_call.1} parent=35 // pred_region
          %282 = dma.done %s275, 2048
        $region44: #{tpu_custom_call.1} parent=35 // pred_fallthru
          _
        // Predicated region
        $region45: #{tpu_custom_call.1} parent=35 // pred_check
          %p283 = pneg %p98
        $region46: #{tpu_custom_call.1} parent=35 // pred_check_branch
          %285 = sbr.rel (%p283) target = $region48
        $region47: #{tpu_custom_call.1} parent=35 // pred_region
          %286 = dma.done [#allocation6], 4096
        $region48: #{tpu_custom_call.1} parent=35 // pred_fallthru
          _
        // Predicated region
        $region49: #{tpu_custom_call.1} parent=35 // pred_check
          %p287 = pneg %p119
        $region50: #{tpu_custom_call.1} parent=35 // pred_check_branch
          %289 = sbr.rel (%p287) target = $region52
        $region51: #{tpu_custom_call.1} parent=35 // pred_region
          %290 = dma.done [#allocation9], 4096
        $region52: #{tpu_custom_call.1} parent=35 // pred_fallthru
          _
        %s291 = sand.u32 %s38, 1
        %s292 = scalar_lea.sflag [#allocation3], %s291
        %s293 = sand.u32 %s38, 1
        %s294 = smul.addr %s293, 128
        %s295 = scalar_lea.vmem [#allocation2], %s294
        %p296 = pneg %p51
        %p297 = pneg %p48
        %s298 = sand.u32 %s30, 1
        %s299 = scalar_lea.sflag [#allocation6], %s298
        %s300 = sand.u32 %s64, 1
        %s301 = smul.addr %s300, 128
        %s302 = scalar_lea.vmem [#allocation5], %s301
        %p303 = pneg %p77
        %p304 = pneg %p74
        %p305 = pneg %p98
        %p306 = pneg %p95
        %p307 = pneg %p119
        %p308 = pneg %p116
        %p309 = pneg %p145
        %p310 = pneg %p142
        %s311 = sand.u32 %s132, 1
        %s312 = scalar_lea.sflag [#allocation4], %s311
        %s313 = sand.u32 %s132, 1
        %s314 = smul.addr %s313, 128
        %s315 = scalar_lea.vmem [#allocation10], %s314
        %p316 = pneg %p171
        %p317 = pneg %p168
        %s318 = sand.u32 %s158, 1
        %s319 = scalar_lea.sflag [#allocation12], %s318
        %s320 = sand.u32 %s158, 1
        %s321 = smul.addr %s320, 128
        %s322 = scalar_lea.vmem [#allocation11], %s321
        %s323 = smul.u32 16, %s30
        %s324 = smul.u32 16, %s30
        %s325 = smul.u32 16, %s30
        %s326 = smul.u32 16, %s30
        %v327 = vld [vmem:[%s269] sm:$0xff]
        %v328 = vld [vmem:[%s269 + $0x8] sm:$0xff]
        %v329 = vld [vmem:[%s269 + $0x10] sm:$0xff]
        %v330 = vld [vmem:[%s269 + $0x18] sm:$0xff]
        %v331 = vld [vmem:[%s269 + $0x20] sm:$0xff]
        %v332 = vld [vmem:[%s269 + $0x28] sm:$0xff]
        %v333 = vld [vmem:[%s269 + $0x30] sm:$0xff]
        %v334 = vld [vmem:[%s269 + $0x38] sm:$0xff]
        %v335 = vld [vmem:[%s269 + $0x40] sm:$0xff]
        %v336 = vld [vmem:[%s269 + $0x48] sm:$0xff]
        %v337 = vld [vmem:[%s269 + $0x50] sm:$0xff]
        %v338 = vld [vmem:[%s269 + $0x58] sm:$0xff]
        %v339 = vld [vmem:[%s269 + $0x60] sm:$0xff]
        %v340 = vld [vmem:[%s269 + $0x68] sm:$0xff]
        %v341 = vld [vmem:[%s269 + $0x70] sm:$0xff]
        %v342 = vld [vmem:[%s269 + $0x78] sm:$0xff]
        %v343 = vld [vmem:[%s278] sm:$0xff]
        %v344 = vld [vmem:[%s278 + $0x8] sm:$0xff]
        %v345 = vld [vmem:[%s278 + $0x10] sm:$0xff]
        %v346 = vld [vmem:[%s278 + $0x18] sm:$0xff]
        %v347 = vld [vmem:[%s278 + $0x20] sm:$0xff]
        %v348 = vld [vmem:[%s278 + $0x28] sm:$0xff]
        %v349 = vld [vmem:[%s278 + $0x30] sm:$0xff]
        %v350 = vld [vmem:[%s278 + $0x38] sm:$0xff]
        %v351 = vld [vmem:[%s278 + $0x40] sm:$0xff]
        %v352 = vld [vmem:[%s278 + $0x48] sm:$0xff]
        %v353 = vld [vmem:[%s278 + $0x50] sm:$0xff]
        %v354 = vld [vmem:[%s278 + $0x58] sm:$0xff]
        %v355 = vld [vmem:[%s278 + $0x60] sm:$0xff]
        %v356 = vld [vmem:[%s278 + $0x68] sm:$0xff]
        %v357 = vld [vmem:[%s278 + $0x70] sm:$0xff]
        %v358 = vld [vmem:[%s278 + $0x78] sm:$0xff]
        %v359 = vld [vmem:[#allocation7] sm:$0xff]
        %v360 = vld [vmem:[#allocation7 + $0x8] sm:$0xff]
        %v361 = vld [vmem:[#allocation7 + $0x10] sm:$0xff]
        %v362 = vld [vmem:[#allocation7 + $0x18] sm:$0xff]
        %v363 = vld [vmem:[#allocation7 + $0x20] sm:$0xff]
        %v364 = vld [vmem:[#allocation7 + $0x28] sm:$0xff]
        %v365 = vld [vmem:[#allocation7 + $0x30] sm:$0xff]
        %v366 = vld [vmem:[#allocation7 + $0x38] sm:$0xff]
        %v367 = vld [vmem:[#allocation7 + $0x40] sm:$0xff]
        %v368 = vld [vmem:[#allocation7 + $0x48] sm:$0xff]
        %v369 = vld [vmem:[#allocation7 + $0x50] sm:$0xff]
        %v370 = vld [vmem:[#allocation7 + $0x58] sm:$0xff]
        %v371 = vld [vmem:[#allocation7 + $0x60] sm:$0xff]
        %v372 = vld [vmem:[#allocation7 + $0x68] sm:$0xff]
        %v373 = vld [vmem:[#allocation7 + $0x70] sm:$0xff]
        %v374 = vld [vmem:[#allocation7 + $0x78] sm:$0xff]
        %v375 = vld [vmem:[#allocation7 + $0x80] sm:$0xff]
        %v376 = vld [vmem:[#allocation7 + $0x88] sm:$0xff]
        %v377 = vld [vmem:[#allocation7 + $0x90] sm:$0xff]
        %v378 = vld [vmem:[#allocation7 + $0x98] sm:$0xff]
        %v379 = vld [vmem:[#allocation7 + $0xa0] sm:$0xff]
        %v380 = vld [vmem:[#allocation7 + $0xa8] sm:$0xff]
        %v381 = vld [vmem:[#allocation7 + $0xb0] sm:$0xff]
        %v382 = vld [vmem:[#allocation7 + $0xb8] sm:$0xff]
        %v383 = vld [vmem:[#allocation7 + $0xc0] sm:$0xff]
        %v384 = vld [vmem:[#allocation7 + $0xc8] sm:$0xff]
        %v385 = vld [vmem:[#allocation7 + $0xd0] sm:$0xff]
        %v386 = vld [vmem:[#allocation7 + $0xd8] sm:$0xff]
        %v387 = vld [vmem:[#allocation7 + $0xe0] sm:$0xff]
        %v388 = vld [vmem:[#allocation7 + $0xe8] sm:$0xff]
        %v389 = vld [vmem:[#allocation7 + $0xf0] sm:$0xff]
        %v390 = vld [vmem:[#allocation7 + $0xf8] sm:$0xff]
        %v391 = vld [vmem:[#allocation8] sm:$0xff]
        %v392 = vld [vmem:[#allocation8 + $0x8] sm:$0xff]
        %v393 = vld [vmem:[#allocation8 + $0x10] sm:$0xff]
        %v394 = vld [vmem:[#allocation8 + $0x18] sm:$0xff]
        %v395 = vld [vmem:[#allocation8 + $0x20] sm:$0xff]
        %v396 = vld [vmem:[#allocation8 + $0x28] sm:$0xff]
        %v397 = vld [vmem:[#allocation8 + $0x30] sm:$0xff]
        %v398 = vld [vmem:[#allocation8 + $0x38] sm:$0xff]
        %v399 = vld [vmem:[#allocation8 + $0x40] sm:$0xff]
        %v400 = vld [vmem:[#allocation8 + $0x48] sm:$0xff]
        %v401 = vld [vmem:[#allocation8 + $0x50] sm:$0xff]
        %v402 = vld [vmem:[#allocation8 + $0x58] sm:$0xff]
        %v403 = vld [vmem:[#allocation8 + $0x60] sm:$0xff]
        %v404 = vld [vmem:[#allocation8 + $0x68] sm:$0xff]
        %v405 = vld [vmem:[#allocation8 + $0x70] sm:$0xff]
        %v406 = vld [vmem:[#allocation8 + $0x78] sm:$0xff]
        %v407 = vld [vmem:[#allocation8 + $0x80] sm:$0xff]
        %v408 = vld [vmem:[#allocation8 + $0x88] sm:$0xff]
        %v409 = vld [vmem:[#allocation8 + $0x90] sm:$0xff]
        %v410 = vld [vmem:[#allocation8 + $0x98] sm:$0xff]
        %v411 = vld [vmem:[#allocation8 + $0xa0] sm:$0xff]
        %v412 = vld [vmem:[#allocation8 + $0xa8] sm:$0xff]
        %v413 = vld [vmem:[#allocation8 + $0xb0] sm:$0xff]
        %v414 = vld [vmem:[#allocation8 + $0xb8] sm:$0xff]
        %v415 = vld [vmem:[#allocation8 + $0xc0] sm:$0xff]
        %v416 = vld [vmem:[#allocation8 + $0xc8] sm:$0xff]
        %v417 = vld [vmem:[#allocation8 + $0xd0] sm:$0xff]
        %v418 = vld [vmem:[#allocation8 + $0xd8] sm:$0xff]
        %v419 = vld [vmem:[#allocation8 + $0xe0] sm:$0xff]
        %v420 = vld [vmem:[#allocation8 + $0xe8] sm:$0xff]
        %v421 = vld [vmem:[#allocation8 + $0xf0] sm:$0xff]
        %v422 = vld [vmem:[#allocation8 + $0xf8] sm:$0xff]
        %vm423 = vcmask 523264
        %v425 = vsel %vm423, %v327, 0
        %v428 = vsel %vm423, %v328, 0
        %v431 = vsel %vm423, %v329, 0
        %v434 = vsel %vm423, %v330, 0
        %v437 = vsel %vm423, %v331, 0
        %v440 = vsel %vm423, %v332, 0
        %v443 = vsel %vm423, %v333, 0
        %v446 = vsel %vm423, %v334, 0
        %v449 = vsel %vm423, %v335, 0
        %v452 = vsel %vm423, %v336, 0
        %v455 = vsel %vm423, %v337, 0
        %v458 = vsel %vm423, %v338, 0
        %v461 = vsel %vm423, %v339, 0
        %v464 = vsel %vm423, %v340, 0
        %v467 = vsel %vm423, %v341, 0
        %v470 = vsel %vm423, %v342, 0
        %v473 = vsel %vm423, %v391, 0
        %v476 = vsel %vm423, %v392, 0
        %v479 = vsel %vm423, %v393, 0
        %v482 = vsel %vm423, %v394, 0
        %v485 = vsel %vm423, %v395, 0
        %v488 = vsel %vm423, %v396, 0
        %v491 = vsel %vm423, %v397, 0
        %v494 = vsel %vm423, %v398, 0
        %v497 = vsel %vm423, %v399, 0
        %v500 = vsel %vm423, %v400, 0
        %v503 = vsel %vm423, %v401, 0
        %v506 = vsel %vm423, %v402, 0
        %v509 = vsel %vm423, %v403, 0
        %v512 = vsel %vm423, %v404, 0
        %v515 = vsel %vm423, %v405, 0
        %v518 = vsel %vm423, %v406, 0
        %v521 = vsel %vm423, %v407, 0
        %v524 = vsel %vm423, %v408, 0
        %v527 = vsel %vm423, %v409, 0
        %v530 = vsel %vm423, %v410, 0
        %v533 = vsel %vm423, %v411, 0
        %v536 = vsel %vm423, %v412, 0
        %v539 = vsel %vm423, %v413, 0
        %v542 = vsel %vm423, %v414, 0
        %v545 = vsel %vm423, %v415, 0
        %v548 = vsel %vm423, %v416, 0
        %v551 = vsel %vm423, %v417, 0
        %v554 = vsel %vm423, %v418, 0
        %v557 = vsel %vm423, %v419, 0
        %v560 = vsel %vm423, %v420, 0
        %v563 = vsel %vm423, %v421, 0
        %v566 = vsel %vm423, %v422, 0
        %568 = vmatprep.subr.mxu0 0.0
        %569 = vmatpush1.xpose.msra.mxu0 %v473
        %570 = vmatprep.subr.mxu0 0.0
        %571 = vmatpush1.xpose.msra.mxu0 %v476
        %572 = vmatprep.subr.mxu0 0.0
        %573 = vmatpush1.xpose.msra.mxu0 %v479
        %574 = vmatprep.subr.mxu0 0.0
        %575 = vmatpush1.xpose.msra.mxu0 %v482
        %576 = vmatprep.subr.mxu0 0.0
        %577 = vmatpush1.xpose.msra.mxu0 %v485
        %578 = vmatprep.subr.mxu0 0.0
        %579 = vmatpush1.xpose.msra.mxu0 %v488
        %580 = vmatprep.subr.mxu0 0.0
        %581 = vmatpush1.xpose.msra.mxu0 %v491
        %582 = vmatprep.subr.mxu0 0.0
        %583 = vmatpush1.xpose.msra.mxu0 %v494
        %584 = vmatprep.subr.mxu0 0.0
        %585 = vmatpush1.xpose.msra.mxu0 %v497
        %586 = vmatprep.subr.mxu0 0.0
        %587 = vmatpush1.xpose.msra.mxu0 %v500
        %588 = vmatprep.subr.mxu0 0.0
        %589 = vmatpush1.xpose.msra.mxu0 %v503
        %590 = vmatprep.subr.mxu0 0.0
        %591 = vmatpush1.xpose.msra.mxu0 %v506
        %592 = vmatprep.subr.mxu0 0.0
        %593 = vmatpush1.xpose.msra.mxu0 %v509
        %594 = vmatprep.subr.mxu0 0.0
        %595 = vmatpush1.xpose.msra.mxu0 %v512
        %596 = vmatprep.subr.mxu0 0.0
        %597 = vmatpush1.xpose.msra.mxu0 %v515
        %598 = vmatprep.subr.mxu0 0.0
        %599 = vmatpush1.xpose.msra.mxu0 %v518
        %600 = vmatprep.subr.mxu0 0.0
        %601 = vmatpush1.xpose.msra.mxu0 %v521
        %602 = vmatprep.subr.mxu0 0.0
        %603 = vmatpush1.xpose.msra.mxu0 %v524
        %604 = vmatprep.subr.mxu0 0.0
        %605 = vmatpush1.xpose.msra.mxu0 %v527
        %606 = vmatprep.subr.mxu0 0.0
        %607 = vmatpush1.xpose.msra.mxu0 %v530
        %608 = vmatprep.subr.mxu0 0.0
        %609 = vmatpush1.xpose.msra.mxu0 %v533
        %610 = vmatprep.subr.mxu0 0.0
        %611 = vmatpush1.xpose.msra.mxu0 %v536
        %612 = vmatprep.subr.mxu0 0.0
        %613 = vmatpush1.xpose.msra.mxu0 %v539
        %614 = vmatprep.subr.mxu0 0.0
        %615 = vmatpush1.xpose.msra.mxu0 %v542
        %616 = vmatprep.subr.mxu0 0.0
        %617 = vmatpush1.xpose.msra.mxu0 %v545
        %618 = vmatprep.subr.mxu0 0.0
        %619 = vmatpush1.xpose.msra.mxu0 %v548
        %620 = vmatprep.subr.mxu0 0.0
        %621 = vmatpush1.xpose.msra.mxu0 %v551
        %622 = vmatprep.subr.mxu0 0.0
        %623 = vmatpush1.xpose.msra.mxu0 %v554
        %624 = vmatprep.subr.mxu0 0.0
        %625 = vmatpush1.xpose.msra.mxu0 %v557
        %626 = vmatprep.subr.mxu0 0.0
        %627 = vmatpush1.xpose.msra.mxu0 %v560
        %628 = vmatprep.subr.mxu0 0.0
        %629 = vmatpush1.xpose.msra.mxu0 %v563
        %630 = vmatprep.subr.mxu0 0.0
        %631 = vmatpush1.xpose.msra.mxu0 %v566
        %632 = vmatprep.mubr.f32.mxu0 0.0
        %633 = vmatmul.mubr.f32.gmra.mrb[0].mxu0 %v425
        %v634 = vpop.f32.mrb[0].mxu0
        %v635 = vadd.f32 0.0, %v634
        %v636 = vpop.f32.mrb[0].mxu0
        %v637 = vadd.f32 0.0, %v636
        %638 = vmatprep.mubr.f32.mxu0 0.0
        %639 = vmatmul.mubr.f32.gmra.mrb[0].mxu0 %v428
        %v640 = vpop.f32.mrb[0].mxu0
        %v641 = vadd.f32 0.0, %v640
        %v642 = vpop.f32.mrb[0].mxu0
        %v643 = vadd.f32 0.0, %v642
        %644 = vmatprep.mubr.f32.mxu0 0.0
        %645 = vmatmul.mubr.f32.gmra.mrb[0].mxu0 %v431
        %v646 = vpop.f32.mrb[0].mxu0
        %v647 = vadd.f32 0.0, %v646
        %v648 = vpop.f32.mrb[0].mxu0
        %v649 = vadd.f32 0.0, %v648
        %650 = vmatprep.mubr.f32.mxu0 0.0
        %651 = vmatmul.mubr.f32.gmra.mrb[0].mxu0 %v434
        %v652 = vpop.f32.mrb[0].mxu0
        %v653 = vadd.f32 0.0, %v652
        %v654 = vpop.f32.mrb[0].mxu0
        %v655 = vadd.f32 0.0, %v654
        %656 = vmatprep.mubr.f32.mxu0 0.0
        %657 = vmatmul.mubr.f32.gmra.mrb[0].mxu0 %v437
        %v658 = vpop.f32.mrb[0].mxu0
        %v659 = vadd.f32 0.0, %v658
        %v660 = vpop.f32.mrb[0].mxu0
        %v661 = vadd.f32 0.0, %v660
        %662 = vmatprep.mubr.f32.mxu0 0.0
        %663 = vmatmul.mubr.f32.gmra.mrb[0].mxu0 %v440
        %v664 = vpop.f32.mrb[0].mxu0
        %v665 = vadd.f32 0.0, %v664
        %v666 = vpop.f32.mrb[0].mxu0
        %v667 = vadd.f32 0.0, %v666
        %668 = vmatprep.mubr.f32.mxu0 0.0
        %669 = vmatmul.mubr.f32.gmra.mrb[0].mxu0 %v443
        %v670 = vpop.f32.mrb[0].mxu0
        %v671 = vadd.f32 0.0, %v670
        %v672 = vpop.f32.mrb[0].mxu0
        %v673 = vadd.f32 0.0, %v672
        %674 = vmatprep.mubr.f32.mxu0 0.0
        %675 = vmatmul.mubr.f32.gmra.mrb[0].mxu0 %v446
        %v676 = vpop.f32.mrb[0].mxu0
        %v677 = vadd.f32 0.0, %v676
        %v678 = vpop.f32.mrb[0].mxu0
        %v679 = vadd.f32 0.0, %v678
        %680 = vmatprep.mubr.f32.mxu0 0.0
        %681 = vmatmul.mubr.f32.gmra.mrb[0].mxu0 %v449
        %v682 = vpop.f32.mrb[0].mxu0
        %v683 = vadd.f32 0.0, %v682
        %v684 = vpop.f32.mrb[0].mxu0
        %v685 = vadd.f32 0.0, %v684
        %686 = vmatprep.mubr.f32.mxu0 0.0
        %687 = vmatmul.mubr.f32.gmra.mrb[0].mxu0 %v452
        %v688 = vpop.f32.mrb[0].mxu0
        %v689 = vadd.f32 0.0, %v688
        %v690 = vpop.f32.mrb[0].mxu0
        %v691 = vadd.f32 0.0, %v690
        %692 = vmatprep.mubr.f32.mxu0 0.0
        %693 = vmatmul.mubr.f32.gmra.mrb[0].mxu0 %v455
        %v694 = vpop.f32.mrb[0].mxu0
        %v695 = vadd.f32 0.0, %v694
        %v696 = vpop.f32.mrb[0].mxu0
        %v697 = vadd.f32 0.0, %v696
        %698 = vmatprep.mubr.f32.mxu0 0.0
        %699 = vmatmul.mubr.f32.gmra.mrb[0].mxu0 %v458
        %v700 = vpop.f32.mrb[0].mxu0
        %v701 = vadd.f32 0.0, %v700
        %v702 = vpop.f32.mrb[0].mxu0
        %v703 = vadd.f32 0.0, %v702
        %704 = vmatprep.mubr.f32.mxu0 0.0
        %705 = vmatmul.mubr.f32.gmra.mrb[0].mxu0 %v461
        %v706 = vpop.f32.mrb[0].mxu0
        %v707 = vadd.f32 0.0, %v706
        %v708 = vpop.f32.mrb[0].mxu0
        %v709 = vadd.f32 0.0, %v708
        %710 = vmatprep.mubr.f32.mxu0 0.0
        %711 = vmatmul.mubr.f32.gmra.mrb[0].mxu0 %v464
        %v712 = vpop.f32.mrb[0].mxu0
        %v713 = vadd.f32 0.0, %v712
        %v714 = vpop.f32.mrb[0].mxu0
        %v715 = vadd.f32 0.0, %v714
        %716 = vmatprep.mubr.f32.mxu0 0.0
        %717 = vmatmul.mubr.f32.gmra.mrb[0].mxu0 %v467
        %v718 = vpop.f32.mrb[0].mxu0
        %v719 = vadd.f32 0.0, %v718
        %v720 = vpop.f32.mrb[0].mxu0
        %v721 = vadd.f32 0.0, %v720
        %722 = vmatprep.mubr.f32.mxu0 0.0
        %723 = vmatmul.mubr.f32.gmra.mrb[0].mxu0 %v470
        %v724 = vpop.f32.mrb[0].mxu0
        %v725 = vadd.f32 0.0, %v724
        %v726 = vpop.f32.mrb[0].mxu0
        %v727 = vadd.f32 0.0, %v726
        %728 = vdwg.mxu0
        %v730 = vsel %vm423, %v343, 0
        %v733 = vsel %vm423, %v344, 0
        %v736 = vsel %vm423, %v345, 0
        %v739 = vsel %vm423, %v346, 0
        %v742 = vsel %vm423, %v347, 0
        %v745 = vsel %vm423, %v348, 0
        %v748 = vsel %vm423, %v349, 0
        %v751 = vsel %vm423, %v350, 0
        %v754 = vsel %vm423, %v351, 0
        %v757 = vsel %vm423, %v352, 0
        %v760 = vsel %vm423, %v353, 0
        %v763 = vsel %vm423, %v354, 0
        %v766 = vsel %vm423, %v355, 0
        %v769 = vsel %vm423, %v356, 0
        %v772 = vsel %vm423, %v357, 0
        %v775 = vsel %vm423, %v358, 0
        %v778 = vsel %vm423, %v359, 0
        %v781 = vsel %vm423, %v360, 0
        %v784 = vsel %vm423, %v361, 0
        %v787 = vsel %vm423, %v362, 0
        %v790 = vsel %vm423, %v363, 0
        %v793 = vsel %vm423, %v364, 0
        %v796 = vsel %vm423, %v365, 0
        %v799 = vsel %vm423, %v366, 0
        %v802 = vsel %vm423, %v367, 0
        %v805 = vsel %vm423, %v368, 0
        %v808 = vsel %vm423, %v369, 0
        %v811 = vsel %vm423, %v370, 0
        %v814 = vsel %vm423, %v371, 0
        %v817 = vsel %vm423, %v372, 0
        %v820 = vsel %vm423, %v373, 0
        %v823 = vsel %vm423, %v374, 0
        %v826 = vsel %vm423, %v375, 0
        %v829 = vsel %vm423, %v376, 0
        %v832 = vsel %vm423, %v377, 0
        %v835 = vsel %vm423, %v378, 0
        %v838 = vsel %vm423, %v379, 0
        %v841 = vsel %vm423, %v380, 0
        %v844 = vsel %vm423, %v381, 0
        %v847 = vsel %vm423, %v382, 0
        %v850 = vsel %vm423, %v383, 0
        %v853 = vsel %vm423, %v384, 0
        %v856 = vsel %vm423, %v385, 0
        %v859 = vsel %vm423, %v386, 0
        %v862 = vsel %vm423, %v387, 0
        %v865 = vsel %vm423, %v388, 0
        %v868 = vsel %vm423, %v389, 0
        %v871 = vsel %vm423, %v390, 0
        %873 = vmatprep.subr.mxu0 0.0
        %874 = vmatpush1.xpose.msra.mxu0 %v778
        %875 = vmatprep.subr.mxu0 0.0
        %876 = vmatpush1.xpose.msra.mxu0 %v781
        %877 = vmatprep.subr.mxu0 0.0
        %878 = vmatpush1.xpose.msra.mxu0 %v784
        %879 = vmatprep.subr.mxu0 0.0
        %880 = vmatpush1.xpose.msra.mxu0 %v787
        %881 = vmatprep.subr.mxu0 0.0
        %882 = vmatpush1.xpose.msra.mxu0 %v790
        %883 = vmatprep.subr.mxu0 0.0
        %884 = vmatpush1.xpose.msra.mxu0 %v793
        %885 = vmatprep.subr.mxu0 0.0
        %886 = vmatpush1.xpose.msra.mxu0 %v796
        %887 = vmatprep.subr.mxu0 0.0
        %888 = vmatpush1.xpose.msra.mxu0 %v799
        %889 = vmatprep.subr.mxu0 0.0
        %890 = vmatpush1.xpose.msra.mxu0 %v802
        %891 = vmatprep.subr.mxu0 0.0
        %892 = vmatpush1.xpose.msra.mxu0 %v805
        %893 = vmatprep.subr.mxu0 0.0
        %894 = vmatpush1.xpose.msra.mxu0 %v808
        %895 = vmatprep.subr.mxu0 0.0
        %896 = vmatpush1.xpose.msra.mxu0 %v811
        %897 = vmatprep.subr.mxu0 0.0
        %898 = vmatpush1.xpose.msra.mxu0 %v814
        %899 = vmatprep.subr.mxu0 0.0
        %900 = vmatpush1.xpose.msra.mxu0 %v817
        %901 = vmatprep.subr.mxu0 0.0
        %902 = vmatpush1.xpose.msra.mxu0 %v820
        %903 = vmatprep.subr.mxu0 0.0
        %904 = vmatpush1.xpose.msra.mxu0 %v823
        %905 = vmatprep.subr.mxu0 0.0
        %906 = vmatpush1.xpose.msra.mxu0 %v826
        %907 = vmatprep.subr.mxu0 0.0
        %908 = vmatpush1.xpose.msra.mxu0 %v829
        %909 = vmatprep.subr.mxu0 0.0
        %910 = vmatpush1.xpose.msra.mxu0 %v832
        %911 = vmatprep.subr.mxu0 0.0
        %912 = vmatpush1.xpose.msra.mxu0 %v835
        %913 = vmatprep.subr.mxu0 0.0
        %914 = vmatpush1.xpose.msra.mxu0 %v838
        %915 = vmatprep.subr.mxu0 0.0
        %916 = vmatpush1.xpose.msra.mxu0 %v841
        %917 = vmatprep.subr.mxu0 0.0
        %918 = vmatpush1.xpose.msra.mxu0 %v844
        %919 = vmatprep.subr.mxu0 0.0
        %920 = vmatpush1.xpose.msra.mxu0 %v847
        %921 = vmatprep.subr.mxu0 0.0
        %922 = vmatpush1.xpose.msra.mxu0 %v850
        %923 = vmatprep.subr.mxu0 0.0
        %924 = vmatpush1.xpose.msra.mxu0 %v853
        %925 = vmatprep.subr.mxu0 0.0
        %926 = vmatpush1.xpose.msra.mxu0 %v856
        %927 = vmatprep.subr.mxu0 0.0
        %928 = vmatpush1.xpose.msra.mxu0 %v859
        %929 = vmatprep.subr.mxu0 0.0
        %930 = vmatpush1.xpose.msra.mxu0 %v862
        %931 = vmatprep.subr.mxu0 0.0
        %932 = vmatpush1.xpose.msra.mxu0 %v865
        %933 = vmatprep.subr.mxu0 0.0
        %934 = vmatpush1.xpose.msra.mxu0 %v868
        %935 = vmatprep.subr.mxu0 0.0
        %936 = vmatpush1.xpose.msra.mxu0 %v871
        %937 = vmatprep.mubr.f32.mxu0 0.0
        %938 = vmatmul.mubr.f32.gmra.mrb[0].mxu0 %v730
        %v939 = vpop.f32.mrb[0].mxu0
        %v940 = vadd.f32 0.0, %v939
        %v941 = vpop.f32.mrb[0].mxu0
        %v942 = vadd.f32 0.0, %v941
        %943 = vmatprep.mubr.f32.mxu0 0.0
        %944 = vmatmul.mubr.f32.gmra.mrb[0].mxu0 %v733
        %v945 = vpop.f32.mrb[0].mxu0
        %v946 = vadd.f32 0.0, %v945
        %v947 = vpop.f32.mrb[0].mxu0
        %v948 = vadd.f32 0.0, %v947
        %949 = vmatprep.mubr.f32.mxu0 0.0
        %950 = vmatmul.mubr.f32.gmra.mrb[0].mxu0 %v736
        %v951 = vpop.f32.mrb[0].mxu0
        %v952 = vadd.f32 0.0, %v951
        %v953 = vpop.f32.mrb[0].mxu0
        %v954 = vadd.f32 0.0, %v953
        %955 = vmatprep.mubr.f32.mxu0 0.0
        %956 = vmatmul.mubr.f32.gmra.mrb[0].mxu0 %v739
        %v957 = vpop.f32.mrb[0].mxu0
        %v958 = vadd.f32 0.0, %v957
        %v959 = vpop.f32.mrb[0].mxu0
        %v960 = vadd.f32 0.0, %v959
        %961 = vmatprep.mubr.f32.mxu0 0.0
        %962 = vmatmul.mubr.f32.gmra.mrb[0].mxu0 %v742
        %v963 = vpop.f32.mrb[0].mxu0
        %v964 = vadd.f32 0.0, %v963
        %v965 = vpop.f32.mrb[0].mxu0
        %v966 = vadd.f32 0.0, %v965
        %967 = vmatprep.mubr.f32.mxu0 0.0
        %968 = vmatmul.mubr.f32.gmra.mrb[0].mxu0 %v745
        %v969 = vpop.f32.mrb[0].mxu0
        %v970 = vadd.f32 0.0, %v969
        %v971 = vpop.f32.mrb[0].mxu0
        %v972 = vadd.f32 0.0, %v971
        %973 = vmatprep.mubr.f32.mxu0 0.0
        %974 = vmatmul.mubr.f32.gmra.mrb[0].mxu0 %v748
        %v975 = vpop.f32.mrb[0].mxu0
        %v976 = vadd.f32 0.0, %v975
        %v977 = vpop.f32.mrb[0].mxu0
        %v978 = vadd.f32 0.0, %v977
        %979 = vmatprep.mubr.f32.mxu0 0.0
        %980 = vmatmul.mubr.f32.gmra.mrb[0].mxu0 %v751
        %v981 = vpop.f32.mrb[0].mxu0
        %v982 = vadd.f32 0.0, %v981
        %v983 = vpop.f32.mrb[0].mxu0
        %v984 = vadd.f32 0.0, %v983
        %985 = vmatprep.mubr.f32.mxu0 0.0
        %986 = vmatmul.mubr.f32.gmra.mrb[0].mxu0 %v754
        %v987 = vpop.f32.mrb[0].mxu0
        %v988 = vadd.f32 0.0, %v987
        %v989 = vpop.f32.mrb[0].mxu0
        %v990 = vadd.f32 0.0, %v989
        %991 = vmatprep.mubr.f32.mxu0 0.0
        %992 = vmatmul.mubr.f32.gmra.mrb[0].mxu0 %v757
        %v993 = vpop.f32.mrb[0].mxu0
        %v994 = vadd.f32 0.0, %v993
        %v995 = vpop.f32.mrb[0].mxu0
        %v996 = vadd.f32 0.0, %v995
        %997 = vmatprep.mubr.f32.mxu0 0.0
        %998 = vmatmul.mubr.f32.gmra.mrb[0].mxu0 %v760
        %v999 = vpop.f32.mrb[0].mxu0
        %v1000 = vadd.f32 0.0, %v999
        %v1001 = vpop.f32.mrb[0].mxu0
        %v1002 = vadd.f32 0.0, %v1001
        %1003 = vmatprep.mubr.f32.mxu0 0.0
        %1004 = vmatmul.mubr.f32.gmra.mrb[0].mxu0 %v763
        %v1005 = vpop.f32.mrb[0].mxu0
        %v1006 = vadd.f32 0.0, %v1005
        %v1007 = vpop.f32.mrb[0].mxu0
        %v1008 = vadd.f32 0.0, %v1007
        %1009 = vmatprep.mubr.f32.mxu0 0.0
        %1010 = vmatmul.mubr.f32.gmra.mrb[0].mxu0 %v766
        %v1011 = vpop.f32.mrb[0].mxu0
        %v1012 = vadd.f32 0.0, %v1011
        %v1013 = vpop.f32.mrb[0].mxu0
        %v1014 = vadd.f32 0.0, %v1013
        %1015 = vmatprep.mubr.f32.mxu0 0.0
        %1016 = vmatmul.mubr.f32.gmra.mrb[0].mxu0 %v769
        %v1017 = vpop.f32.mrb[0].mxu0
        %v1018 = vadd.f32 0.0, %v1017
        %v1019 = vpop.f32.mrb[0].mxu0
        %v1020 = vadd.f32 0.0, %v1019
        %1021 = vmatprep.mubr.f32.mxu0 0.0
        %1022 = vmatmul.mubr.f32.gmra.mrb[0].mxu0 %v772
        %v1023 = vpop.f32.mrb[0].mxu0
        %v1024 = vadd.f32 0.0, %v1023
        %v1025 = vpop.f32.mrb[0].mxu0
        %v1026 = vadd.f32 0.0, %v1025
        %1027 = vmatprep.mubr.f32.mxu0 0.0
        %1028 = vmatmul.mubr.f32.gmra.mrb[0].mxu0 %v775
        %v1029 = vpop.f32.mrb[0].mxu0
        %v1030 = vadd.f32 0.0, %v1029
        %v1031 = vpop.f32.mrb[0].mxu0
        %v1032 = vadd.f32 0.0, %v1031
        %1033 = vdwg.mxu0
        %v1034 = vmul.f32 %v327, %v343
        %v1035 = vmul.f32 %v328, %v344
        %v1036 = vmul.f32 %v329, %v345
        %v1037 = vmul.f32 %v330, %v346
        %v1038 = vmul.f32 %v331, %v347
        %v1039 = vmul.f32 %v332, %v348
        %v1040 = vmul.f32 %v333, %v349
        %v1041 = vmul.f32 %v334, %v350
        %v1042 = vmul.f32 %v335, %v351
        %v1043 = vmul.f32 %v336, %v352
        %v1044 = vmul.f32 %v337, %v353
        %v1045 = vmul.f32 %v338, %v354
        %v1046 = vmul.f32 %v339, %v355
        %v1047 = vmul.f32 %v340, %v356
        %v1048 = vmul.f32 %v341, %v357
        %v1049 = vmul.f32 %v342, %v358
        %v1050 = vsel %vm423, %v1034, 0.0
        %1051 = vadd.xlane.f32.xlu0 %v1050
        %v1052 = vpop.xlane.xlu0 %1051
        %v1053 = vsel %vm423, %v1035, 0.0
        %1054 = vadd.xlane.f32.xlu0 %v1053
        %v1055 = vpop.xlane.xlu0 %1054
        %v1056 = vsel %vm423, %v1036, 0.0
        %1057 = vadd.xlane.f32.xlu0 %v1056
        %v1058 = vpop.xlane.xlu0 %1057
        %v1059 = vsel %vm423, %v1037, 0.0
        %1060 = vadd.xlane.f32.xlu0 %v1059
        %v1061 = vpop.xlane.xlu0 %1060
        %v1062 = vsel %vm423, %v1038, 0.0
        %1063 = vadd.xlane.f32.xlu0 %v1062
        %v1064 = vpop.xlane.xlu0 %1063
        %v1065 = vsel %vm423, %v1039, 0.0
        %1066 = vadd.xlane.f32.xlu0 %v1065
        %v1067 = vpop.xlane.xlu0 %1066
        %v1068 = vsel %vm423, %v1040, 0.0
        %1069 = vadd.xlane.f32.xlu0 %v1068
        %v1070 = vpop.xlane.xlu0 %1069
        %v1071 = vsel %vm423, %v1041, 0.0
        %1072 = vadd.xlane.f32.xlu0 %v1071
        %v1073 = vpop.xlane.xlu0 %1072
        %v1074 = vsel %vm423, %v1042, 0.0
        %1075 = vadd.xlane.f32.xlu0 %v1074
        %v1076 = vpop.xlane.xlu0 %1075
        %v1077 = vsel %vm423, %v1043, 0.0
        %1078 = vadd.xlane.f32.xlu0 %v1077
        %v1079 = vpop.xlane.xlu0 %1078
        %v1080 = vsel %vm423, %v1044, 0.0
        %1081 = vadd.xlane.f32.xlu0 %v1080
        %v1082 = vpop.xlane.xlu0 %1081
        %v1083 = vsel %vm423, %v1045, 0.0
        %1084 = vadd.xlane.f32.xlu0 %v1083
        %v1085 = vpop.xlane.xlu0 %1084
        %v1086 = vsel %vm423, %v1046, 0.0
        %1087 = vadd.xlane.f32.xlu0 %v1086
        %v1088 = vpop.xlane.xlu0 %1087
        %v1089 = vsel %vm423, %v1047, 0.0
        %1090 = vadd.xlane.f32.xlu0 %v1089
        %v1091 = vpop.xlane.xlu0 %1090
        %v1092 = vsel %vm423, %v1048, 0.0
        %1093 = vadd.xlane.f32.xlu0 %v1092
        %v1094 = vpop.xlane.xlu0 %1093
        %v1095 = vsel %vm423, %v1049, 0.0
        %1096 = vadd.xlane.f32.xlu0 %v1095
        %v1097 = vpop.xlane.xlu0 %1096
        %v1098 = vmax.f32 %v635, %v637
        %1099 = vmax.xlane.f32.xlu0 %v1098
        %v1100 = vpop.xlane.xlu0 %1099
        %v1101 = vmax.f32 %v641, %v643
        %1102 = vmax.xlane.f32.xlu0 %v1101
        %v1103 = vpop.xlane.xlu0 %1102
        %v1104 = vmax.f32 %v647, %v649
        %1105 = vmax.xlane.f32.xlu0 %v1104
        %v1106 = vpop.xlane.xlu0 %1105
        %v1107 = vmax.f32 %v653, %v655
        %1108 = vmax.xlane.f32.xlu0 %v1107
        %v1109 = vpop.xlane.xlu0 %1108
        %v1110 = vmax.f32 %v659, %v661
        %1111 = vmax.xlane.f32.xlu0 %v1110
        %v1112 = vpop.xlane.xlu0 %1111
        %v1113 = vmax.f32 %v665, %v667
        %1114 = vmax.xlane.f32.xlu0 %v1113
        %v1115 = vpop.xlane.xlu0 %1114
        %v1116 = vmax.f32 %v671, %v673
        %1117 = vmax.xlane.f32.xlu0 %v1116
        %v1118 = vpop.xlane.xlu0 %1117
        %v1119 = vmax.f32 %v677, %v679
        %1120 = vmax.xlane.f32.xlu0 %v1119
        %v1121 = vpop.xlane.xlu0 %1120
        %v1122 = vmax.f32 %v683, %v685
        %1123 = vmax.xlane.f32.xlu0 %v1122
        %v1124 = vpop.xlane.xlu0 %1123
        %v1125 = vmax.f32 %v689, %v691
        %1126 = vmax.xlane.f32.xlu0 %v1125
        %v1127 = vpop.xlane.xlu0 %1126
        %v1128 = vmax.f32 %v695, %v697
        %1129 = vmax.xlane.f32.xlu0 %v1128
        %v1130 = vpop.xlane.xlu0 %1129
        %v1131 = vmax.f32 %v701, %v703
        %1132 = vmax.xlane.f32.xlu0 %v1131
        %v1133 = vpop.xlane.xlu0 %1132
        %v1134 = vmax.f32 %v707, %v709
        %1135 = vmax.xlane.f32.xlu0 %v1134
        %v1136 = vpop.xlane.xlu0 %1135
        %v1137 = vmax.f32 %v713, %v715
        %1138 = vmax.xlane.f32.xlu0 %v1137
        %v1139 = vpop.xlane.xlu0 %1138
        %v1140 = vmax.f32 %v719, %v721
        %1141 = vmax.xlane.f32.xlu0 %v1140
        %v1142 = vpop.xlane.xlu0 %1141
        %v1143 = vmax.f32 %v725, %v727
        %1144 = vmax.xlane.f32.xlu0 %v1143
        %v1145 = vpop.xlane.xlu0 %1144
        %v1146 = vsub.f32 %v635, %v1100
        %v1147 = vsub.f32 %v637, %v1100
        %v1148 = vsub.f32 %v641, %v1103
        %v1149 = vsub.f32 %v643, %v1103
        %v1150 = vsub.f32 %v647, %v1106
        %v1151 = vsub.f32 %v649, %v1106
        %v1152 = vsub.f32 %v653, %v1109
        %v1153 = vsub.f32 %v655, %v1109
        %v1154 = vsub.f32 %v659, %v1112
        %v1155 = vsub.f32 %v661, %v1112
        %v1156 = vsub.f32 %v665, %v1115
        %v1157 = vsub.f32 %v667, %v1115
        %v1158 = vsub.f32 %v671, %v1118
        %v1159 = vsub.f32 %v673, %v1118
        %v1160 = vsub.f32 %v677, %v1121
        %v1161 = vsub.f32 %v679, %v1121
        %v1162 = vsub.f32 %v683, %v1124
        %v1163 = vsub.f32 %v685, %v1124
        %v1164 = vsub.f32 %v689, %v1127
        %v1165 = vsub.f32 %v691, %v1127
        %v1166 = vsub.f32 %v695, %v1130
        %v1167 = vsub.f32 %v697, %v1130
        %v1168 = vsub.f32 %v701, %v1133
        %v1169 = vsub.f32 %v703, %v1133
        %v1170 = vsub.f32 %v707, %v1136
        %v1171 = vsub.f32 %v709, %v1136
        %v1172 = vsub.f32 %v713, %v1139
        %v1173 = vsub.f32 %v715, %v1139
        %v1174 = vsub.f32 %v719, %v1142
        %v1175 = vsub.f32 %v721, %v1142
        %v1176 = vsub.f32 %v725, %v1145
        %v1177 = vsub.f32 %v727, %v1145
        %v1178 = vmul.f32 %v1146, 1.442695
        %v1179 = vpow.pop %v1178
        %v1180 = vmul.f32 %v1147, 1.442695
        %v1181 = vpow.pop %v1180
        %v1182 = vmul.f32 %v1148, 1.442695
        %v1183 = vpow.pop %v1182
        %v1184 = vmul.f32 %v1149, 1.442695
        %v1185 = vpow.pop %v1184
        %v1186 = vmul.f32 %v1150, 1.442695
        %v1187 = vpow.pop %v1186
        %v1188 = vmul.f32 %v1151, 1.442695
        %v1189 = vpow.pop %v1188
        %v1190 = vmul.f32 %v1152, 1.442695
        %v1191 = vpow.pop %v1190
        %v1192 = vmul.f32 %v1153, 1.442695
        %v1193 = vpow.pop %v1192
        %v1194 = vmul.f32 %v1154, 1.442695
        %v1195 = vpow.pop %v1194
        %v1196 = vmul.f32 %v1155, 1.442695
        %v1197 = vpow.pop %v1196
        %v1198 = vmul.f32 %v1156, 1.442695
        %v1199 = vpow.pop %v1198
        %v1200 = vmul.f32 %v1157, 1.442695
        %v1201 = vpow.pop %v1200
        %v1202 = vmul.f32 %v1158, 1.442695
        %v1203 = vpow.pop %v1202
        %v1204 = vmul.f32 %v1159, 1.442695
        %v1205 = vpow.pop %v1204
        %v1206 = vmul.f32 %v1160, 1.442695
        %v1207 = vpow.pop %v1206
        %v1208 = vmul.f32 %v1161, 1.442695
        %v1209 = vpow.pop %v1208
        %v1210 = vmul.f32 %v1162, 1.442695
        %v1211 = vpow.pop %v1210
        %v1212 = vmul.f32 %v1163, 1.442695
        %v1213 = vpow.pop %v1212
        %v1214 = vmul.f32 %v1164, 1.442695
        %v1215 = vpow.pop %v1214
        %v1216 = vmul.f32 %v1165, 1.442695
        %v1217 = vpow.pop %v1216
        %v1218 = vmul.f32 %v1166, 1.442695
        %v1219 = vpow.pop %v1218
        %v1220 = vmul.f32 %v1167, 1.442695
        %v1221 = vpow.pop %v1220
        %v1222 = vmul.f32 %v1168, 1.442695
        %v1223 = vpow.pop %v1222
        %v1224 = vmul.f32 %v1169, 1.442695
        %v1225 = vpow.pop %v1224
        %v1226 = vmul.f32 %v1170, 1.442695
        %v1227 = vpow.pop %v1226
        %v1228 = vmul.f32 %v1171, 1.442695
        %v1229 = vpow.pop %v1228
        %v1230 = vmul.f32 %v1172, 1.442695
        %v1231 = vpow.pop %v1230
        %v1232 = vmul.f32 %v1173, 1.442695
        %v1233 = vpow.pop %v1232
        %v1234 = vmul.f32 %v1174, 1.442695
        %v1235 = vpow.pop %v1234
        %v1236 = vmul.f32 %v1175, 1.442695
        %v1237 = vpow.pop %v1236
        %v1238 = vmul.f32 %v1176, 1.442695
        %v1239 = vpow.pop %v1238
        %v1240 = vmul.f32 %v1177, 1.442695
        %v1241 = vpow.pop %v1240
        %v1242 = vadd.f32 %v1179, %v1181
        %1243 = vadd.xlane.f32.xlu0 %v1242
        %v1244 = vpop.xlane.xlu0 %1243
        %v1245 = vadd.f32 %v1183, %v1185
        %1246 = vadd.xlane.f32.xlu0 %v1245
        %v1247 = vpop.xlane.xlu0 %1246
        %v1248 = vadd.f32 %v1187, %v1189
        %1249 = vadd.xlane.f32.xlu0 %v1248
        %v1250 = vpop.xlane.xlu0 %1249
        %v1251 = vadd.f32 %v1191, %v1193
        %1252 = vadd.xlane.f32.xlu0 %v1251
        %v1253 = vpop.xlane.xlu0 %1252
        %v1254 = vadd.f32 %v1195, %v1197
        %1255 = vadd.xlane.f32.xlu0 %v1254
        %v1256 = vpop.xlane.xlu0 %1255
        %v1257 = vadd.f32 %v1199, %v1201
        %1258 = vadd.xlane.f32.xlu0 %v1257
        %v1259 = vpop.xlane.xlu0 %1258
        %v1260 = vadd.f32 %v1203, %v1205
        %1261 = vadd.xlane.f32.xlu0 %v1260
        %v1262 = vpop.xlane.xlu0 %1261
        %v1263 = vadd.f32 %v1207, %v1209
        %1264 = vadd.xlane.f32.xlu0 %v1263
        %v1265 = vpop.xlane.xlu0 %1264
        %v1266 = vadd.f32 %v1211, %v1213
        %1267 = vadd.xlane.f32.xlu0 %v1266
        %v1268 = vpop.xlane.xlu0 %1267
        %v1269 = vadd.f32 %v1215, %v1217
        %1270 = vadd.xlane.f32.xlu0 %v1269
        %v1271 = vpop.xlane.xlu0 %1270
        %v1272 = vadd.f32 %v1219, %v1221
        %1273 = vadd.xlane.f32.xlu0 %v1272
        %v1274 = vpop.xlane.xlu0 %1273
        %v1275 = vadd.f32 %v1223, %v1225
        %1276 = vadd.xlane.f32.xlu0 %v1275
        %v1277 = vpop.xlane.xlu0 %1276
        %v1278 = vadd.f32 %v1227, %v1229
        %1279 = vadd.xlane.f32.xlu0 %v1278
        %v1280 = vpop.xlane.xlu0 %1279
        %v1281 = vadd.f32 %v1231, %v1233
        %1282 = vadd.xlane.f32.xlu0 %v1281
        %v1283 = vpop.xlane.xlu0 %1282
        %v1284 = vadd.f32 %v1235, %v1237
        %1285 = vadd.xlane.f32.xlu0 %v1284
        %v1286 = vpop.xlane.xlu0 %1285
        %v1287 = vadd.f32 %v1239, %v1241
        %1288 = vadd.xlane.f32.xlu0 %v1287
        %v1289 = vpop.xlane.xlu0 %1288
        %v1290 = vlog2.pop %v1244
        %v1291 = vmul.f32 %v1290, 0.6931472
        %v1292 = vlog2.pop %v1247
        %v1293 = vmul.f32 %v1292, 0.6931472
        %v1294 = vlog2.pop %v1250
        %v1295 = vmul.f32 %v1294, 0.6931472
        %v1296 = vlog2.pop %v1253
        %v1297 = vmul.f32 %v1296, 0.6931472
        %v1298 = vlog2.pop %v1256
        %v1299 = vmul.f32 %v1298, 0.6931472
        %v1300 = vlog2.pop %v1259
        %v1301 = vmul.f32 %v1300, 0.6931472
        %v1302 = vlog2.pop %v1262
        %v1303 = vmul.f32 %v1302, 0.6931472
        %v1304 = vlog2.pop %v1265
        %v1305 = vmul.f32 %v1304, 0.6931472
        %v1306 = vlog2.pop %v1268
        %v1307 = vmul.f32 %v1306, 0.6931472
        %v1308 = vlog2.pop %v1271
        %v1309 = vmul.f32 %v1308, 0.6931472
        %v1310 = vlog2.pop %v1274
        %v1311 = vmul.f32 %v1310, 0.6931472
        %v1312 = vlog2.pop %v1277
        %v1313 = vmul.f32 %v1312, 0.6931472
        %v1314 = vlog2.pop %v1280
        %v1315 = vmul.f32 %v1314, 0.6931472
        %v1316 = vlog2.pop %v1283
        %v1317 = vmul.f32 %v1316, 0.6931472
        %v1318 = vlog2.pop %v1286
        %v1319 = vmul.f32 %v1318, 0.6931472
        %v1320 = vlog2.pop %v1289
        %v1321 = vmul.f32 %v1320, 0.6931472
        %v1322 = vadd.f32 %v1100, %v1291
        %v1323 = vadd.f32 %v1103, %v1293
        %v1324 = vadd.f32 %v1106, %v1295
        %v1325 = vadd.f32 %v1109, %v1297
        %v1326 = vadd.f32 %v1112, %v1299
        %v1327 = vadd.f32 %v1115, %v1301
        %v1328 = vadd.f32 %v1118, %v1303
        %v1329 = vadd.f32 %v1121, %v1305
        %v1330 = vadd.f32 %v1124, %v1307
        %v1331 = vadd.f32 %v1127, %v1309
        %v1332 = vadd.f32 %v1130, %v1311
        %v1333 = vadd.f32 %v1133, %v1313
        %v1334 = vadd.f32 %v1136, %v1315
        %v1335 = vadd.f32 %v1139, %v1317
        %v1336 = vadd.f32 %v1142, %v1319
        %v1337 = vadd.f32 %v1145, %v1321
        %v1338 = vsub.f32 %v1322, %v1052
        %v1339 = vsub.f32 %v1323, %v1055
        %v1340 = vsub.f32 %v1324, %v1058
        %v1341 = vsub.f32 %v1325, %v1061
        %v1342 = vsub.f32 %v1326, %v1064
        %v1343 = vsub.f32 %v1327, %v1067
        %v1344 = vsub.f32 %v1328, %v1070
        %v1345 = vsub.f32 %v1329, %v1073
        %v1346 = vsub.f32 %v1330, %v1076
        %v1347 = vsub.f32 %v1331, %v1079
        %v1348 = vsub.f32 %v1332, %v1082
        %v1349 = vsub.f32 %v1333, %v1085
        %v1350 = vsub.f32 %v1334, %v1088
        %v1351 = vsub.f32 %v1335, %v1091
        %v1352 = vsub.f32 %v1336, %v1094
        %v1353 = vsub.f32 %v1337, %v1097
        %vm1354 = vcmask 7168
        %1355 = vst.msk [vmem:[%s315] sm:$0xff] %vm1354, %v1338
        %1356 = vst.msk [vmem:[%s315 + $0x8] sm:$0xff] %vm1354, %v1339
        %1357 = vst.msk [vmem:[%s315 + $0x10] sm:$0xff] %vm1354, %v1340
        %1358 = vst.msk [vmem:[%s315 + $0x18] sm:$0xff] %vm1354, %v1341
        %1359 = vst.msk [vmem:[%s315 + $0x20] sm:$0xff] %vm1354, %v1342
        %1360 = vst.msk [vmem:[%s315 + $0x28] sm:$0xff] %vm1354, %v1343
        %1361 = vst.msk [vmem:[%s315 + $0x30] sm:$0xff] %vm1354, %v1344
        %1362 = vst.msk [vmem:[%s315 + $0x38] sm:$0xff] %vm1354, %v1345
        %1363 = vst.msk [vmem:[%s315 + $0x40] sm:$0xff] %vm1354, %v1346
        %1364 = vst.msk [vmem:[%s315 + $0x48] sm:$0xff] %vm1354, %v1347
        %1365 = vst.msk [vmem:[%s315 + $0x50] sm:$0xff] %vm1354, %v1348
        %1366 = vst.msk [vmem:[%s315 + $0x58] sm:$0xff] %vm1354, %v1349
        %1367 = vst.msk [vmem:[%s315 + $0x60] sm:$0xff] %vm1354, %v1350
        %1368 = vst.msk [vmem:[%s315 + $0x68] sm:$0xff] %vm1354, %v1351
        %1369 = vst.msk [vmem:[%s315 + $0x70] sm:$0xff] %vm1354, %v1352
        %1370 = vst.msk [vmem:[%s315 + $0x78] sm:$0xff] %vm1354, %v1353
        %v1371 = vmax.f32 %v940, %v942
        %1372 = vmax.xlane.f32.xlu0 %v1371
        %v1373 = vpop.xlane.xlu0 %1372
        %v1374 = vmax.f32 %v946, %v948
        %1375 = vmax.xlane.f32.xlu0 %v1374
        %v1376 = vpop.xlane.xlu0 %1375
        %v1377 = vmax.f32 %v952, %v954
        %1378 = vmax.xlane.f32.xlu0 %v1377
        %v1379 = vpop.xlane.xlu0 %1378
        %v1380 = vmax.f32 %v958, %v960
        %1381 = vmax.xlane.f32.xlu0 %v1380
        %v1382 = vpop.xlane.xlu0 %1381
        %v1383 = vmax.f32 %v964, %v966
        %1384 = vmax.xlane.f32.xlu0 %v1383
        %v1385 = vpop.xlane.xlu0 %1384
        %v1386 = vmax.f32 %v970, %v972
        %1387 = vmax.xlane.f32.xlu0 %v1386
        %v1388 = vpop.xlane.xlu0 %1387
        %v1389 = vmax.f32 %v976, %v978
        %1390 = vmax.xlane.f32.xlu0 %v1389
        %v1391 = vpop.xlane.xlu0 %1390
        %v1392 = vmax.f32 %v982, %v984
        %1393 = vmax.xlane.f32.xlu0 %v1392
        %v1394 = vpop.xlane.xlu0 %1393
        %v1395 = vmax.f32 %v988, %v990
        %1396 = vmax.xlane.f32.xlu0 %v1395
        %v1397 = vpop.xlane.xlu0 %1396
        %v1398 = vmax.f32 %v994, %v996
        %1399 = vmax.xlane.f32.xlu0 %v1398
        %v1400 = vpop.xlane.xlu0 %1399
        %v1401 = vmax.f32 %v1000, %v1002
        %1402 = vmax.xlane.f32.xlu0 %v1401
        %v1403 = vpop.xlane.xlu0 %1402
        %v1404 = vmax.f32 %v1006, %v1008
        %1405 = vmax.xlane.f32.xlu0 %v1404
        %v1406 = vpop.xlane.xlu0 %1405
        %v1407 = vmax.f32 %v1012, %v1014
        %1408 = vmax.xlane.f32.xlu0 %v1407
        %v1409 = vpop.xlane.xlu0 %1408
        %v1410 = vmax.f32 %v1018, %v1020
        %1411 = vmax.xlane.f32.xlu0 %v1410
        %v1412 = vpop.xlane.xlu0 %1411
        %v1413 = vmax.f32 %v1024, %v1026
        %1414 = vmax.xlane.f32.xlu0 %v1413
        %v1415 = vpop.xlane.xlu0 %1414
        %v1416 = vmax.f32 %v1030, %v1032
        %1417 = vmax.xlane.f32.xlu0 %v1416
        %v1418 = vpop.xlane.xlu0 %1417
        %v1419 = vsub.f32 %v940, %v1373
        %v1420 = vsub.f32 %v942, %v1373
        %v1421 = vsub.f32 %v946, %v1376
        %v1422 = vsub.f32 %v948, %v1376
        %v1423 = vsub.f32 %v952, %v1379
        %v1424 = vsub.f32 %v954, %v1379
        %v1425 = vsub.f32 %v958, %v1382
        %v1426 = vsub.f32 %v960, %v1382
        %v1427 = vsub.f32 %v964, %v1385
        %v1428 = vsub.f32 %v966, %v1385
        %v1429 = vsub.f32 %v970, %v1388
        %v1430 = vsub.f32 %v972, %v1388
        %v1431 = vsub.f32 %v976, %v1391
        %v1432 = vsub.f32 %v978, %v1391
        %v1433 = vsub.f32 %v982, %v1394
        %v1434 = vsub.f32 %v984, %v1394
        %v1435 = vsub.f32 %v988, %v1397
        %v1436 = vsub.f32 %v990, %v1397
        %v1437 = vsub.f32 %v994, %v1400
        %v1438 = vsub.f32 %v996, %v1400
        %v1439 = vsub.f32 %v1000, %v1403
        %v1440 = vsub.f32 %v1002, %v1403
        %v1441 = vsub.f32 %v1006, %v1406
        %v1442 = vsub.f32 %v1008, %v1406
        %v1443 = vsub.f32 %v1012, %v1409
        %v1444 = vsub.f32 %v1014, %v1409
        %v1445 = vsub.f32 %v1018, %v1412
        %v1446 = vsub.f32 %v1020, %v1412
        %v1447 = vsub.f32 %v1024, %v1415
        %v1448 = vsub.f32 %v1026, %v1415
        %v1449 = vsub.f32 %v1030, %v1418
        %v1450 = vsub.f32 %v1032, %v1418
        %v1451 = vmul.f32 %v1419, 1.442695
        %v1452 = vpow.pop %v1451
        %v1453 = vmul.f32 %v1420, 1.442695
        %v1454 = vpow.pop %v1453
        %v1455 = vmul.f32 %v1421, 1.442695
        %v1456 = vpow.pop %v1455
        %v1457 = vmul.f32 %v1422, 1.442695
        %v1458 = vpow.pop %v1457
        %v1459 = vmul.f32 %v1423, 1.442695
        %v1460 = vpow.pop %v1459
        %v1461 = vmul.f32 %v1424, 1.442695
        %v1462 = vpow.pop %v1461
        %v1463 = vmul.f32 %v1425, 1.442695
        %v1464 = vpow.pop %v1463
        %v1465 = vmul.f32 %v1426, 1.442695
        %v1466 = vpow.pop %v1465
        %v1467 = vmul.f32 %v1427, 1.442695
        %v1468 = vpow.pop %v1467
        %v1469 = vmul.f32 %v1428, 1.442695
        %v1470 = vpow.pop %v1469
        %v1471 = vmul.f32 %v1429, 1.442695
        %v1472 = vpow.pop %v1471
        %v1473 = vmul.f32 %v1430, 1.442695
        %v1474 = vpow.pop %v1473
        %v1475 = vmul.f32 %v1431, 1.442695
        %v1476 = vpow.pop %v1475
        %v1477 = vmul.f32 %v1432, 1.442695
        %v1478 = vpow.pop %v1477
        %v1479 = vmul.f32 %v1433, 1.442695
        %v1480 = vpow.pop %v1479
        %v1481 = vmul.f32 %v1434, 1.442695
        %v1482 = vpow.pop %v1481
        %v1483 = vmul.f32 %v1435, 1.442695
        %v1484 = vpow.pop %v1483
        %v1485 = vmul.f32 %v1436, 1.442695
        %v1486 = vpow.pop %v1485
        %v1487 = vmul.f32 %v1437, 1.442695
        %v1488 = vpow.pop %v1487
        %v1489 = vmul.f32 %v1438, 1.442695
        %v1490 = vpow.pop %v1489
        %v1491 = vmul.f32 %v1439, 1.442695
        %v1492 = vpow.pop %v1491
        %v1493 = vmul.f32 %v1440, 1.442695
        %v1494 = vpow.pop %v1493
        %v1495 = vmul.f32 %v1441, 1.442695
        %v1496 = vpow.pop %v1495
        %v1497 = vmul.f32 %v1442, 1.442695
        %v1498 = vpow.pop %v1497
        %v1499 = vmul.f32 %v1443, 1.442695
        %v1500 = vpow.pop %v1499
        %v1501 = vmul.f32 %v1444, 1.442695
        %v1502 = vpow.pop %v1501
        %v1503 = vmul.f32 %v1445, 1.442695
        %v1504 = vpow.pop %v1503
        %v1505 = vmul.f32 %v1446, 1.442695
        %v1506 = vpow.pop %v1505
        %v1507 = vmul.f32 %v1447, 1.442695
        %v1508 = vpow.pop %v1507
        %v1509 = vmul.f32 %v1448, 1.442695
        %v1510 = vpow.pop %v1509
        %v1511 = vmul.f32 %v1449, 1.442695
        %v1512 = vpow.pop %v1511
        %v1513 = vmul.f32 %v1450, 1.442695
        %v1514 = vpow.pop %v1513
        %v1515 = vadd.f32 %v1452, %v1454
        %1516 = vadd.xlane.f32.xlu0 %v1515
        %v1517 = vpop.xlane.xlu0 %1516
        %v1518 = vadd.f32 %v1456, %v1458
        %1519 = vadd.xlane.f32.xlu0 %v1518
        %v1520 = vpop.xlane.xlu0 %1519
        %v1521 = vadd.f32 %v1460, %v1462
        %1522 = vadd.xlane.f32.xlu0 %v1521
        %v1523 = vpop.xlane.xlu0 %1522
        %v1524 = vadd.f32 %v1464, %v1466
        %1525 = vadd.xlane.f32.xlu0 %v1524
        %v1526 = vpop.xlane.xlu0 %1525
        %v1527 = vadd.f32 %v1468, %v1470
        %1528 = vadd.xlane.f32.xlu0 %v1527
        %v1529 = vpop.xlane.xlu0 %1528
        %v1530 = vadd.f32 %v1472, %v1474
        %1531 = vadd.xlane.f32.xlu0 %v1530
        %v1532 = vpop.xlane.xlu0 %1531
        %v1533 = vadd.f32 %v1476, %v1478
        %1534 = vadd.xlane.f32.xlu0 %v1533
        %v1535 = vpop.xlane.xlu0 %1534
        %v1536 = vadd.f32 %v1480, %v1482
        %1537 = vadd.xlane.f32.xlu0 %v1536
        %v1538 = vpop.xlane.xlu0 %1537
        %v1539 = vadd.f32 %v1484, %v1486
        %1540 = vadd.xlane.f32.xlu0 %v1539
        %v1541 = vpop.xlane.xlu0 %1540
        %v1542 = vadd.f32 %v1488, %v1490
        %1543 = vadd.xlane.f32.xlu0 %v1542
        %v1544 = vpop.xlane.xlu0 %1543
        %v1545 = vadd.f32 %v1492, %v1494
        %1546 = vadd.xlane.f32.xlu0 %v1545
        %v1547 = vpop.xlane.xlu0 %1546
        %v1548 = vadd.f32 %v1496, %v1498
        %1549 = vadd.xlane.f32.xlu0 %v1548
        %v1550 = vpop.xlane.xlu0 %1549
        %v1551 = vadd.f32 %v1500, %v1502
        %1552 = vadd.xlane.f32.xlu0 %v1551
        %v1553 = vpop.xlane.xlu0 %1552
        %v1554 = vadd.f32 %v1504, %v1506
        %1555 = vadd.xlane.f32.xlu0 %v1554
        %v1556 = vpop.xlane.xlu0 %1555
        %v1557 = vadd.f32 %v1508, %v1510
        %1558 = vadd.xlane.f32.xlu0 %v1557
        %v1559 = vpop.xlane.xlu0 %1558
        %v1560 = vadd.f32 %v1512, %v1514
        %1561 = vadd.xlane.f32.xlu0 %v1560
        %v1562 = vpop.xlane.xlu0 %1561
        %v1563 = vlog2.pop %v1517
        %v1564 = vmul.f32 %v1563, 0.6931472
        %v1565 = vlog2.pop %v1520
        %v1566 = vmul.f32 %v1565, 0.6931472
        %v1567 = vlog2.pop %v1523
        %v1568 = vmul.f32 %v1567, 0.6931472
        %v1569 = vlog2.pop %v1526
        %v1570 = vmul.f32 %v1569, 0.6931472
        %v1571 = vlog2.pop %v1529
        %v1572 = vmul.f32 %v1571, 0.6931472
        %v1573 = vlog2.pop %v1532
        %v1574 = vmul.f32 %v1573, 0.6931472
        %v1575 = vlog2.pop %v1535
        %v1576 = vmul.f32 %v1575, 0.6931472
        %v1577 = vlog2.pop %v1538
        %v1578 = vmul.f32 %v1577, 0.6931472
        %v1579 = vlog2.pop %v1541
        %v1580 = vmul.f32 %v1579, 0.6931472
        %v1581 = vlog2.pop %v1544
        %v1582 = vmul.f32 %v1581, 0.6931472
        %v1583 = vlog2.pop %v1547
        %v1584 = vmul.f32 %v1583, 0.6931472
        %v1585 = vlog2.pop %v1550
        %v1586 = vmul.f32 %v1585, 0.6931472
        %v1587 = vlog2.pop %v1553
        %v1588 = vmul.f32 %v1587, 0.6931472
        %v1589 = vlog2.pop %v1556
        %v1590 = vmul.f32 %v1589, 0.6931472
        %v1591 = vlog2.pop %v1559
        %v1592 = vmul.f32 %v1591, 0.6931472
        %v1593 = vlog2.pop %v1562
        %v1594 = vmul.f32 %v1593, 0.6931472
        %v1595 = vadd.f32 %v1373, %v1564
        %v1596 = vadd.f32 %v1376, %v1566
        %v1597 = vadd.f32 %v1379, %v1568
        %v1598 = vadd.f32 %v1382, %v1570
        %v1599 = vadd.f32 %v1385, %v1572
        %v1600 = vadd.f32 %v1388, %v1574
        %v1601 = vadd.f32 %v1391, %v1576
        %v1602 = vadd.f32 %v1394, %v1578
        %v1603 = vadd.f32 %v1397, %v1580
        %v1604 = vadd.f32 %v1400, %v1582
        %v1605 = vadd.f32 %v1403, %v1584
        %v1606 = vadd.f32 %v1406, %v1586
        %v1607 = vadd.f32 %v1409, %v1588
        %v1608 = vadd.f32 %v1412, %v1590
        %v1609 = vadd.f32 %v1415, %v1592
        %v1610 = vadd.f32 %v1418, %v1594
        %v1611 = vsub.f32 %v1595, %v1052
        %v1612 = vsub.f32 %v1596, %v1055
        %v1613 = vsub.f32 %v1597, %v1058
        %v1614 = vsub.f32 %v1598, %v1061
        %v1615 = vsub.f32 %v1599, %v1064
        %v1616 = vsub.f32 %v1600, %v1067
        %v1617 = vsub.f32 %v1601, %v1070
        %v1618 = vsub.f32 %v1602, %v1073
        %v1619 = vsub.f32 %v1603, %v1076
        %v1620 = vsub.f32 %v1604, %v1079
        %v1621 = vsub.f32 %v1605, %v1082
        %v1622 = vsub.f32 %v1606, %v1085
        %v1623 = vsub.f32 %v1607, %v1088
        %v1624 = vsub.f32 %v1608, %v1091
        %v1625 = vsub.f32 %v1609, %v1094
        %v1626 = vsub.f32 %v1610, %v1097
        %1627 = vst.msk [vmem:[%s322] sm:$0xff] %vm1354, %v1611
        %1628 = vst.msk [vmem:[%s322 + $0x8] sm:$0xff] %vm1354, %v1612
        %1629 = vst.msk [vmem:[%s322 + $0x10] sm:$0xff] %vm1354, %v1613
        %1630 = vst.msk [vmem:[%s322 + $0x18] sm:$0xff] %vm1354, %v1614
        %1631 = vst.msk [vmem:[%s322 + $0x20] sm:$0xff] %vm1354, %v1615
        %1632 = vst.msk [vmem:[%s322 + $0x28] sm:$0xff] %vm1354, %v1616
        %1633 = vst.msk [vmem:[%s322 + $0x30] sm:$0xff] %vm1354, %v1617
        %1634 = vst.msk [vmem:[%s322 + $0x38] sm:$0xff] %vm1354, %v1618
        %1635 = vst.msk [vmem:[%s322 + $0x40] sm:$0xff] %vm1354, %v1619
        %1636 = vst.msk [vmem:[%s322 + $0x48] sm:$0xff] %vm1354, %v1620
        %1637 = vst.msk [vmem:[%s322 + $0x50] sm:$0xff] %vm1354, %v1621
        %1638 = vst.msk [vmem:[%s322 + $0x58] sm:$0xff] %vm1354, %v1622
        %1639 = vst.msk [vmem:[%s322 + $0x60] sm:$0xff] %vm1354, %v1623
        %1640 = vst.msk [vmem:[%s322 + $0x68] sm:$0xff] %vm1354, %v1624
        %1641 = vst.msk [vmem:[%s322 + $0x70] sm:$0xff] %vm1354, %v1625
        %1642 = vst.msk [vmem:[%s322 + $0x78] sm:$0xff] %vm1354, %v1626
        %s1643 = sand.u32 %s132, 1
        %s1644 = scalar_lea.sflag [#allocation4], %s1643
        %s1645 = sand.u32 %s132, 1
        %s1646 = smul.addr %s1645, 128
        %s1647 = scalar_lea.vmem [#allocation10], %s1646
        %s1648 = sand.u32 %s158, 1
        %s1649 = scalar_lea.sflag [#allocation12], %s1648
        %s1650 = sand.u32 %s158, 1
        %s1651 = smul.addr %s1650, 128
        %s1652 = scalar_lea.vmem [#allocation11], %s1651
        // Predicated region
        $region53: #{tpu_custom_call.1} parent=35 // pred_check
          %p1653 = pneg %p142
        $region54: #{tpu_custom_call.1} parent=35 // pred_check_branch
          %1655 = sbr.rel (%p1653) target = $region56
        $region55: #{tpu_custom_call.1} parent=35 // pred_region
          %s1656 = smul.u32 16, %s30
          %s1658 = ssub.s32 2048, 2048
          %1659 = vsyncadd %s1644, %s1658
          %s1660 = smul.addr %s1656, 128
          %s1661 = scalar_lea.hbm %s4, %s1660
          %s1662 = sshll.u32 %s1647, 4
          %s1663 = int_to_ptr.vmem [resolvable:$true] %s1662
          %1668 = dma.vmem_to_hbm [thread:$0]  %s1663, 2048, %s1661, %s1644, 128, 128, 8
        $region56: #{tpu_custom_call.1} parent=35 // pred_fallthru
          _
        // Predicated region
        $region57: #{tpu_custom_call.1} parent=35 // pred_check
          %p1669 = pneg %p168
        $region58: #{tpu_custom_call.1} parent=35 // pred_check_branch
          %1671 = sbr.rel (%p1669) target = $region60
        $region59: #{tpu_custom_call.1} parent=35 // pred_region
          %s1672 = smul.u32 16, %s30
          %s1674 = ssub.s32 2048, 2048
          %1675 = vsyncadd %s1649, %s1674
          %s1676 = smul.addr %s1672, 128
          %s1677 = scalar_lea.hbm %s5, %s1676
          %s1678 = sshll.u32 %s1652, 4
          %s1679 = int_to_ptr.vmem [resolvable:$true] %s1678
          %1684 = dma.vmem_to_hbm [thread:$0]  %s1679, 2048, %s1677, %s1649, 128, 128, 8
        $region60: #{tpu_custom_call.1} parent=35 // pred_fallthru
          _
      $region36: #{tpu_custom_call.1} parent=5 // pred_fallthru
        _
      %p1685 = scmp.le.s32.totalorder 2, %s25
      // Predicated region
      $region61: #{tpu_custom_call.1} parent=5 // pred_check
        %p1686 = pneg %p1685
      $region62: #{tpu_custom_call.1} parent=5 // pred_check_branch
        %1688 = sbr.rel (%p1686) target = $region64
      $region63: #{tpu_custom_call.1} parent=5 // pred_region
        %s1689 = ssub.s32 %s25, 2
        // Predicated region
        $region65: #{tpu_custom_call.1} parent=63 // pred_check
          %p1690 = pneg %p148
        $region66: #{tpu_custom_call.1} parent=63 // pred_check_branch
          %1692 = sbr.rel (%p1690) target = $region68
        $region67: #{tpu_custom_call.1} parent=63 // pred_region
          %s1693 = sand.u32 %s133, 1
          %s1694 = scalar_lea.sflag [#allocation4], %s1693
          %s1695 = sand.u32 %s133, 1
          %s1696 = smul.addr %s1695, 128
          %s1697 = scalar_lea.vmem [#allocation10], %s1696
          %1698 = dma.done %s1694, 2048
        $region68: #{tpu_custom_call.1} parent=63 // pred_fallthru
          _
        // Predicated region
        $region69: #{tpu_custom_call.1} parent=63 // pred_check
          %p1699 = pneg %p174
        $region70: #{tpu_custom_call.1} parent=63 // pred_check_branch
          %1701 = sbr.rel (%p1699) target = $region72
        $region71: #{tpu_custom_call.1} parent=63 // pred_region
          %s1702 = sand.u32 %s159, 1
          %s1703 = scalar_lea.sflag [#allocation12], %s1702
          %s1704 = sand.u32 %s159, 1
          %s1705 = smul.addr %s1704, 128
          %s1706 = scalar_lea.vmem [#allocation11], %s1705
          %1707 = dma.done %s1703, 2048
        $region72: #{tpu_custom_call.1} parent=63 // pred_fallthru
          _
      $region64: #{tpu_custom_call.1} parent=5 // pred_fallthru
        _
    $region6: #{tpu_custom_call.1} parent=1 // loop_footer
      %s29 = sadd.s32 1, %s25
    $region7: #{tpu_custom_call.1} parent=1 // loop_footer_branch
      %24 = sbr.rel target = $region3
    $region8: #{tpu_custom_call.1} parent=1 // loop_exit
      _
    %1708 = vsyncpa [#allocation3], 1
    %s1709 = scalar_lea.sflag [#allocation3], 1
    %1710 = vsyncpa %s1709, 1
    %1711 = vsyncpa [#allocation6], 1
    %s1712 = scalar_lea.sflag [#allocation6], 1
    %1713 = vsyncpa %s1712, 1
    %1714 = vsyncpa [#allocation9], 1
    %1715 = vsyncpa [#allocation4], 1
    %s1716 = scalar_lea.sflag [#allocation4], 1
    %1717 = vsyncpa %s1716, 1
    %1718 = vsyncpa [#allocation12], 1
    %s1719 = scalar_lea.sflag [#allocation12], 1
    %1720 = vsyncpa %s1719, 1

</llo_original>
